<compile_context>
chip_gen: v5e
topology: v5e:2x2
jax: 0.10.0
libtpu: 0.0.40
codegen_flags: <defaults>
</compile_context>

<pallas_src>
import numpy as np
import jax
import jax.numpy as jnp
from jax.experimental import pallas as pl
from jax.experimental.pallas import tpu as pltpu


_VMEM_LIMIT = 32 * 1024 * 1024   # explicit scoped-VMEM budget (v7x-safe)
_PAD = 128                       # lane padding of the c2 slab (>= W+1; 128 keeps the main store aligned)


# ------------------------- fused block kernel -------------------------------

def _make_block_kernel(H, W, res, cin, cout, stride, projection, p_stride):
    """Whole SE-ResNet block for ONE image per grid step.

    Layout: channels on sublanes, flattened spatial (H*W) on lanes."""
    M = H * W
    Mo = M // (stride * stride)
    inv_mo = 1.0 / float(Mo)

    def kernel(*refs):
        refs = list(refs)
        x_ref, w1, b1, w2, b2, w3, b3, wse1, wse2 = refs[:9]
        idx = 9
        if stride == 2:
            sel = refs[idx]; idx += 1
        if projection:
            wp = refs[idx]; bp = refs[idx + 1]; idx += 2
        o_ref = refs[idx]
        slab = refs[idx + 1]

        x = x_ref[0]                                     # (cin, M) f32
        x_bf = x.astype(jnp.bfloat16)

        # ---- c1: 1x1 conv + BN + ReLU  ->  (res, M) f32 ----
        f1 = jnp.dot(w1[...], x_bf, preferred_element_type=jnp.float32)
        f1 = jnp.maximum(f1 + b1[...], 0.0)

        # ---- c2: 3x3 conv (pad=1) via a zero-padded lane slab ----
        # slab[:, _PAD + q] = f1[:, q]; the +-W halo rows are zeros for free,
        # only the column wrap (kw = 0 / 2) needs a mask.  Zero the slab every
        # step (megacore-safe: each core owns its own scratch).
        slab[...] = jnp.zeros_like(slab)
        slab[:, _PAD:_PAD + M] = f1

        lane = jax.lax.broadcasted_iota(jnp.int32, (1, M), 1)
        wcol = lane % W
        not_left = wcol != 0
        not_right = wcol != (W - 1)

        acc2 = jnp.zeros((res, M), jnp.float32)
        for kh in range(3):
            for kw in range(3):
                d = (kh - 1) * W + (kw - 1)
                tap = slab[:, _PAD + d:_PAD + d + M].astype(jnp.bfloat16)
                if kw == 0:
                    tap = jnp.where(not_left, tap, jnp.zeros_like(tap))
                elif kw == 2:
                    tap = jnp.where(not_right, tap, jnp.zeros_like(tap))
                acc2 = acc2 + jnp.dot(w2[kh * 3 + kw], tap,
                                      preferred_element_type=jnp.float32)
        f2 = jnp.maximum(acc2 + b2[...], 0.0).astype(jnp.bfloat16)   # (res, M)
        if stride == 2:
            # Exact 0/1 selection matmul: stride-2 downsample on the MXU.
            f2 = jnp.dot(f2, sel[...],
                         preferred_element_type=jnp.float32).astype(jnp.bfloat16)

        # ---- c3: 1x1 conv + BN  ->  (cout, Mo) f32 ----
        f3 = jnp.dot(w3[...], f2, preferred_element_type=jnp.float32) + b3[...]

        # ---- SE gate (all in-kernel, f32) ----
        pooled = jnp.sum(f3, axis=1, keepdims=True) * inv_mo            # (cout, 1)
        g1 = jnp.maximum(
            jnp.sum(wse1[...] * pooled, axis=0, keepdims=True), 0.0)    # (1, cout//r)
        g2 = jnp.sum(wse2[...] * g1, axis=1, keepdims=True)             # (cout, 1)
        gate = 1.0 / (1.0 + jnp.exp(-g2))

        # ---- shortcut (identity or fused 1x1 projection conv + BN) ----
        if projection:
            if p_stride == 2:
                xs = jnp.dot(x_bf, sel[...],
                             preferred_element_type=jnp.float32).astype(jnp.bfloat16)
            else:
                xs = x_bf
            xres = jnp.dot(wp[...], xs, preferred_element_type=jnp.float32) + bp[...]
        else:
            xres = x                                     # cin == cout, M == Mo

        # ---- SE scale + residual + ReLU ----
        o_ref[0] = jnp.maximum(f3 * gate + xres, 0.0).astype(o_ref.dtype)

    return kernel


def resnet_block_pallas(x_nchw, KP):
    """Forward pass. x_nchw: (B, Cin, H, W) f32 -> (B, Cout, Ho, Wo) f32."""
    B, cin, H, W = x_nchw.shape
    assert cin == KP["cin"] and H == KP["H"] and W == KP["W"]
    stride, projection, p_stride = KP["stride"], KP["projection"], KP["p_stride"]
    res, cout = KP["res"], KP["cout"]
    M = H * W
    Ho, Wo = H // stride, W // stride
    Mo = Ho * Wo

    # NCHW is already (C, H*W) per image -> metadata-only reshape, no transpose.
    x2 = x_nchw.reshape(B, cin, M).astype(jnp.float32)

    def full(shape):
        n = len(shape)
        return pl.BlockSpec(shape, lambda b: (0,) * n)

    inputs = [x2, KP["w1"], KP["b1"], KP["w2"], KP["b2"], KP["w3"], KP["b3"],
              KP["wse1"], KP["wse2"]]
    in_specs = [pl.BlockSpec((1, cin, M), lambda b: (b, 0, 0)),
                full((res, cin)), full((res, 1)),
                full((9, res, res)), full((res, 1)),
                full((cout, res)), full((cout, 1)),
                full(tuple(KP["wse1"].shape)), full(tuple(KP["wse2"].shape))]
    if stride == 2:
        inputs.append(KP["sel"])
        in_specs.append(full((M, Mo)))
    if projection:
        inputs += [KP["wp"], KP["bp"]]
        in_specs += [full((cout, cin)), full((cout, 1))]

    out = pl.pallas_call(
        _make_block_kernel(H, W, res, cin, cout, stride, projection, p_stride),
        out_shape=jax.ShapeDtypeStruct((B, cout, Mo), jnp.float32),
        grid=(B,),
        in_specs=in_specs,
        out_specs=pl.BlockSpec((1, cout, Mo), lambda b: (b, 0, 0)),
        scratch_shapes=[pltpu.VMEM((res, M + 2 * _PAD), jnp.float32)],
        compiler_params=pltpu.CompilerParams(
            dimension_semantics=("parallel",),
            vmem_limit_bytes=_VMEM_LIMIT),
    )(*inputs)
    return out.reshape(B, cout, Ho, Wo)


# ----------------------- Parameter construction ----------------------------

def _conv_bn_params(key, kh, kw, cin, cout, eps=1e-5):
    """Conv2d(bias=False) weight (HWIO) with BatchNorm folded in (eval mode)."""
    k = jax.random.split(key, 5)
    w = jax.random.normal(k[0], (kh, kw, cin, cout), jnp.float32) / np.sqrt(kh * kw * cin)
    gamma = 1.0 + 0.1 * jax.random.normal(k[1], (cout,), jnp.float32)
    beta = 0.1 * jax.random.normal(k[2], (cout,), jnp.float32)
    mean = 0.1 * jax.random.normal(k[3], (cout,), jnp.float32)
    var = jax.random.uniform(k[4], (cout,), jnp.float32, minval=0.5, maxval=1.5)
    s = gamma / jnp.sqrt(var + eps)
    return w * s, beta - mean * s


def build_resnet_block_params(key, in_channels, out_channels, r, first=False):
    """Mirrors ResNetBlock.__init__ (forward only uses `p` when projection)."""
    res_channels = in_channels // 4
    stride = 1
    projection = in_channels != out_channels
    P = {"projection": projection, "r": r,
         "in_channels": in_channels, "out_channels": out_channels}
    keys = jax.random.split(key, 6)
    if projection:
        stride = 2
        res_channels = in_channels // 2
        P["p_stride"] = 2
        P["wp"], P["bp"] = _conv_bn_params(keys[0], 1, 1, in_channels, out_channels)
    if first:
        stride = 1
        res_channels = in_channels
        P["p_stride"] = 1
        P["wp"], P["bp"] = _conv_bn_params(keys[0], 1, 1, in_channels, out_channels)
    P["stride"] = stride
    P["res_channels"] = res_channels
    P["w1"], P["b1"] = _conv_bn_params(keys[1], 1, 1, in_channels, res_channels)
    P["w2"], P["b2"] = _conv_bn_params(keys[2], 3, 3, res_channels, res_channels)
    P["w3"], P["b3"] = _conv_bn_params(keys[3], 1, 1, res_channels, out_channels)
    # SE linears (bias=False); stored as (in, out) so reference does y = x @ W.
    P["wse1"] = jax.random.normal(keys[4], (out_channels, out_channels // r),
                                  jnp.float32) / np.sqrt(out_channels)
    P["wse2"] = jax.random.normal(keys[5], (out_channels // r, out_channels),
                                  jnp.float32) / np.sqrt(out_channels // r)
    return P


def _make_sel(H, W, stride):
    """0/1 selection matrix mapping full-res flattened pixels -> strided pixels."""
    Ho, Wo = H // stride, W // stride
    sel = np.zeros((H * W, Ho * Wo), np.float32)
    for ho in range(Ho):
        for wo in range(Wo):
            sel[(stride * ho) * W + stride * wo, ho * Wo + wo] = 1.0
    return jnp.asarray(sel, jnp.bfloat16)


def prepare_kernel_params(P, H, W):
    """One-time layout/dtype prep (no per-forward converts): bf16 (Cout, Cin)
    matmul weights, (C, 1) f32 biases, stride-2 selection matrix."""
    cin, cout, res = P["in_channels"], P["out_channels"], P["res_channels"]
    stride = P["stride"]
    projection = P["projection"]
    p_stride = P.get("p_stride", 1) if projection else 1
    assert p_stride == 1 or stride == 2
    KP = dict(H=H, W=W, cin=cin, cout=cout, res=res, stride=stride,
              projection=projection, p_stride=p_stride)
    KP["w1"] = jnp.asarray(P["w1"].reshape(cin, res).T, jnp.bfloat16)        # (res, cin)
    KP["b1"] = jnp.asarray(P["b1"].reshape(res, 1), jnp.float32)
    KP["w2"] = jnp.asarray(jnp.transpose(P["w2"], (0, 1, 3, 2)).reshape(9, res, res),
                           jnp.bfloat16)                                     # (9, out, in)
    KP["b2"] = jnp.asarray(P["b2"].reshape(res, 1), jnp.float32)
    KP["w3"] = jnp.asarray(P["w3"].reshape(res, cout).T, jnp.bfloat16)       # (cout, res)
    KP["b3"] = jnp.asarray(P["b3"].reshape(cout, 1), jnp.float32)
    KP["wse1"] = jnp.asarray(P["wse1"], jnp.float32)                         # (cout, cout//r)
    KP["wse2"] = jnp.asarray(P["wse2"].T, jnp.float32)                       # (cout, cout//r)
    if stride == 2:
        KP["sel"] = _make_sel(H, W, 2)
    if projection:
        KP["wp"] = jnp.asarray(P["wp"].reshape(cin, cout).T, jnp.bfloat16)   # (cout, cin)
        KP["bp"] = jnp.asarray(P["bp"].reshape(cout, 1), jnp.float32)
    return KP


# ------------------------- Pure-JAX reference ------------------------------

def _conv_ref(x, w, b, stride, pad):
    y = jax.lax.conv_general_dilated(
        x, w, window_strides=(stride, stride),
        padding=[(pad, pad), (pad, pad)],
        dimension_numbers=("NHWC", "HWIO", "NHWC"),
        precision=jax.lax.Precision.HIGHEST)
    return y + b


def reference_forward(x_nchw, P):
    x = jnp.transpose(x_nchw, (0, 2, 3, 1)).astype(jnp.float32)
    f = jax.nn.relu(_conv_ref(x, P["w1"], P["b1"], 1, 0))
    f = jax.nn.relu(_conv_ref(f, P["w2"], P["b2"], P["stride"], 1))
    f = _conv_ref(f, P["w3"], P["b3"], 1, 0)
    s = jnp.mean(f, axis=(1, 2))
    s = jax.nn.relu(jnp.dot(s, P["wse1"], precision=jax.lax.Precision.HIGHEST))
    s = jax.nn.sigmoid(jnp.dot(s, P["wse2"], precision=jax.lax.Precision.HIGHEST))
    f = f * s[:, None, None, :]
    xr = _conv_ref(x, P["wp"], P["bp"], P["p_stride"], 0) if P["projection"] else x
    h = jax.nn.relu(f + xr)
    return jnp.transpose(h, (0, 3, 1, 2))


# --------------------------------- main -------------------------------------

if __name__ == "__main__":
    key = jax.random.PRNGKey(0)
    kx, kp1, kp2, kp3 = jax.random.split(key, 4)

    # Input in PyTorch NCHW convention.
    x = jax.random.normal(kx, (2, 32, 16, 16), jnp.float32)
    H, W = 16, 16

    cases = [
        ("identity shortcut (in==out, stride 1)",
         build_resnet_block_params(kp1, 32, 32, r=4, first=False)),
        ("projection shortcut (in!=out, stride 2)",
         build_resnet_block_params(kp2, 32, 64, r=4, first=False)),
        ("first block (in!=out, stride-1 projection)",
         build_resnet_block_params(kp3, 32, 64, r=4, first=True)),
    ]

    for name, P in cases:
        KP = prepare_kernel_params(P, H, W)
        out = jax.block_until_ready(resnet_block_pallas(x, KP))
        ref = reference_forward(x, P)
        # Tolerance reflects bf16 MXU operands with f32 accumulation.
        np.testing.assert_allclose(np.asarray(out), np.asarray(ref),
                                   rtol=2e-2, atol=3e-2, err_msg=name)

    print("KERNEL_OK")
</pallas_src>

<mosaic_0001>
module attributes {stable_mosaic.version = 11 : i64} {
  func.func @kernel(%arg0: i32, %arg1: memref<1x32x256xf32, #tpu.memory_space<vmem>>, %arg2: memref<8x32xbf16, #tpu.memory_space<vmem>>, %arg3: memref<8x1xf32, #tpu.memory_space<vmem>>, %arg4: memref<9x8x8xbf16, #tpu.memory_space<vmem>>, %arg5: memref<8x1xf32, #tpu.memory_space<vmem>>, %arg6: memref<32x8xbf16, #tpu.memory_space<vmem>>, %arg7: memref<32x1xf32, #tpu.memory_space<vmem>>, %arg8: memref<32x8xf32, #tpu.memory_space<vmem>>, %arg9: memref<32x8xf32, #tpu.memory_space<vmem>>, %arg10: memref<1x32x256xf32, #tpu.memory_space<vmem>>, %arg11: memref<8x512xf32, #tpu.memory_space<vmem>>) attributes {dimension_semantics = [#tpu.dimension_semantics<parallel>], iteration_bounds = array<i64: 2>, scalar_prefetch = 0 : i64, scratch_operands = 1 : i64, tpu.core_type = #tpu.core_type<tc>, window_params = [{transform_indices = @transform_0, window_bounds = array<i64: 1, 32, 256>}, {pipeline_mode = #tpu.pipeline_mode<synchronous>, transform_indices = @transform_1, window_bounds = array<i64: 8, 32>}, {pipeline_mode = #tpu.pipeline_mode<synchronous>, transform_indices = @transform_2, window_bounds = array<i64: 8, 1>}, {pipeline_mode = #tpu.pipeline_mode<synchronous>, transform_indices = @transform_3, window_bounds = array<i64: 9, 8, 8>}, {pipeline_mode = #tpu.pipeline_mode<synchronous>, transform_indices = @transform_4, window_bounds = array<i64: 8, 1>}, {pipeline_mode = #tpu.pipeline_mode<synchronous>, transform_indices = @transform_5, window_bounds = array<i64: 32, 8>}, {pipeline_mode = #tpu.pipeline_mode<synchronous>, transform_indices = @transform_6, window_bounds = array<i64: 32, 1>}, {pipeline_mode = #tpu.pipeline_mode<synchronous>, transform_indices = @transform_7, window_bounds = array<i64: 32, 8>}, {pipeline_mode = #tpu.pipeline_mode<synchronous>, transform_indices = @transform_8, window_bounds = array<i64: 32, 8>}, {transform_indices = @transform_9, window_bounds = array<i64: 1, 32, 256>}]} {
    %c0 = arith.constant 0 : index
    %c0_0 = arith.constant 0 : index
    %c0_1 = arith.constant 0 : index
    %0 = vector.load %arg1[%c0, %c0_0, %c0_1] : memref<1x32x256xf32, #tpu.memory_space<vmem>>, vector<1x32x256xf32>
    %1 = vector.shape_cast %0 : vector<1x32x256xf32> to vector<32x256xf32>
    %2 = arith.truncf %1 : vector<32x256xf32> to vector<32x256xbf16>
    %c0_2 = arith.constant 0 : index
    %c0_3 = arith.constant 0 : index
    %3 = vector.load %arg2[%c0_2, %c0_3] : memref<8x32xbf16, #tpu.memory_space<vmem>>, vector<8x32xbf16>
    %cst = arith.constant dense<0.000000e+00> : vector<8x256xf32>
    %4 = tpu.matmul %3, %2, %cst {dimension_numbers = #tpu.dot_dimension_numbers<[1], [0], [0], [1], [0, 0, 1, 1], [], []>} : vector<8x32xbf16>, vector<32x256xbf16>, vector<8x256xf32> -> vector<8x256xf32>
    %c0_4 = arith.constant 0 : index
    %c0_5 = arith.constant 0 : index
    %5 = vector.load %arg3[%c0_4, %c0_5] : memref<8x1xf32, #tpu.memory_space<vmem>>, vector<8x1xf32>
    %6 = vector.broadcast %5 : vector<8x1xf32> to vector<8x256xf32>
    %7 = arith.addf %4, %6 : vector<8x256xf32>
    %cst_6 = arith.constant 0.000000e+00 : f32
    %8 = vector.broadcast %cst_6 : f32 to vector<8x256xf32>
    %9 = arith.maximumf %7, %8 : vector<8x256xf32>
    %cst_7 = arith.constant 0.000000e+00 : f32
    %10 = vector.broadcast %cst_7 : f32 to vector<8x512xf32>
    %c0_8 = arith.constant 0 : index
    %c0_9 = arith.constant 0 : index
    %11 = vector.load %arg11[%c0_8, %c0_9] : memref<8x512xf32, #tpu.memory_space<vmem>>, vector<8x512xf32>
    tpu.vector_store %arg11[%c0_8, %c0_9], %10 {strides = array<i32>} : memref<8x512xf32, #tpu.memory_space<vmem>>, vector<8x512xf32>,
    %c0_10 = arith.constant 0 : index
    %c128 = arith.constant 128 : index
    %12 = vector.load %arg11[%c0_10, %c128] : memref<8x512xf32, #tpu.memory_space<vmem>>, vector<8x256xf32>
    tpu.vector_store %arg11[%c0_10, %c128], %9 {strides = array<i32>} : memref<8x512xf32, #tpu.memory_space<vmem>>, vector<8x256xf32>,
    %13 = tpu.iota {dimensions = array<i32: 1>} : vector<1x256xi32>
    %c16_i32 = arith.constant 16 : i32
    %c0_i32 = arith.constant 0 : i32
    %14 = arith.cmpi eq, %c16_i32, %c0_i32 : i32
    %c1_i32 = arith.constant 1 : i32
    %15 = arith.select %14, %c1_i32, %c16_i32 : i32
    %16 = vector.broadcast %15 : i32 to vector<1x256xi32>
    %17 = arith.remsi %13, %16 : vector<1x256xi32>
    %c0_i32_11 = arith.constant 0 : i32
    %18 = vector.broadcast %c0_i32_11 : i32 to vector<1x256xi32>
    %19 = arith.cmpi ne, %17, %18 : vector<1x256xi32>
    %c0_i32_12 = arith.constant 0 : i32
    %20 = vector.broadcast %c0_i32_12 : i32 to vector<1x256xi32>
    %21 = arith.cmpi slt, %17, %20 : vector<1x256xi32>
    %c0_i32_13 = arith.constant 0 : i32
    %22 = arith.cmpi slt, %15, %c0_i32_13 : i32
    %23 = vector.broadcast %22 : i1 to vector<1x256xi1>
    %24 = vector.broadcast %23 : vector<1x256xi1> to vector<1x256xi1>
    %25 = arith.xori %21, %24 : vector<1x256xi1>
    %26 = arith.andi %25, %19 : vector<1x256xi1>
    %27 = vector.broadcast %15 : i32 to vector<1x256xi32>
    %28 = arith.addi %17, %27 : vector<1x256xi32>
    %29 = arith.select %26, %28, %17 : vector<1x256xi1>, vector<1x256xi32>
    %c0_i32_14 = arith.constant 0 : i32
    %30 = vector.broadcast %c0_i32_14 : i32 to vector<1x256xi32>
    %31 = arith.cmpi ne, %29, %30 : vector<1x256xi32>
    %c15_i32 = arith.constant 15 : i32
    %32 = vector.broadcast %c15_i32 : i32 to vector<1x256xi32>
    %33 = arith.cmpi ne, %29, %32 : vector<1x256xi32>
    %cst_15 = arith.constant 0.000000e+00 : f32
    %34 = vector.broadcast %cst_15 : f32 to vector<8x256xf32>
    %c0_16 = arith.constant 0 : index
    %c111 = arith.constant 111 : index
    %35 = vector.load %arg11[%c0_16, %c111] : memref<8x512xf32, #tpu.memory_space<vmem>>, vector<8x256xf32>
    %36 = arith.truncf %35 : vector<8x256xf32> to vector<8x256xbf16>
    %cst_17 = arith.constant 0.000000e+00 : bf16
    %37 = vector.broadcast %cst_17 : bf16 to vector<8x256xbf16>
    %38 = vector.shape_cast %31 : vector<1x256xi1> to vector<1x256xi1>
    %39 = vector.broadcast %38 : vector<1x256xi1> to vector<8x256xi1>
    %40 = arith.select %39, %36, %37 : vector<8x256xi1>, vector<8x256xbf16>
    %c0_18 = arith.constant 0 : index
    %c0_19 = arith.constant 0 : index
    %c0_20 = arith.constant 0 : index
    %41 = vector.load %arg4[%c0_18, %c0_19, %c0_20] : memref<9x8x8xbf16, #tpu.memory_space<vmem>>, vector<1x8x8xbf16>
    %42 = vector.shape_cast %41 : vector<1x8x8xbf16> to vector<8x8xbf16>
    %cst_21 = arith.constant dense<0.000000e+00> : vector<8x256xf32>
    %43 = tpu.matmul %42, %40, %cst_21 {dimension_numbers = #tpu.dot_dimension_numbers<[1], [0], [0], [1], [0, 0, 1, 1], [], []>} : vector<8x8xbf16>, vector<8x256xbf16>, vector<8x256xf32> -> vector<8x256xf32>
    %44 = arith.addf %34, %43 : vector<8x256xf32>
    %c0_22 = arith.constant 0 : index
    %c112 = arith.constant 112 : index
    %45 = vector.load %arg11[%c0_22, %c112] : memref<8x512xf32, #tpu.memory_space<vmem>>, vector<8x256xf32>
    %46 = arith.truncf %45 : vector<8x256xf32> to vector<8x256xbf16>
    %c1 = arith.constant 1 : index
    %c0_23 = arith.constant 0 : index
    %c0_24 = arith.constant 0 : index
    %47 = vector.load %arg4[%c1, %c0_23, %c0_24] : memref<9x8x8xbf16, #tpu.memory_space<vmem>>, vector<1x8x8xbf16>
    %48 = vector.shape_cast %47 : vector<1x8x8xbf16> to vector<8x8xbf16>
    %cst_25 = arith.constant dense<0.000000e+00> : vector<8x256xf32>
    %49 = tpu.matmul %48, %46, %cst_25 {dimension_numbers = #tpu.dot_dimension_numbers<[1], [0], [0], [1], [0, 0, 1, 1], [], []>} : vector<8x8xbf16>, vector<8x256xbf16>, vector<8x256xf32> -> vector<8x256xf32>
    %50 = arith.addf %44, %49 : vector<8x256xf32>
    %c0_26 = arith.constant 0 : index
    %c113 = arith.constant 113 : index
    %51 = vector.load %arg11[%c0_26, %c113] : memref<8x512xf32, #tpu.memory_space<vmem>>, vector<8x256xf32>
    %52 = arith.truncf %51 : vector<8x256xf32> to vector<8x256xbf16>
    %cst_27 = arith.constant 0.000000e+00 : bf16
    %53 = vector.broadcast %cst_27 : bf16 to vector<8x256xbf16>
    %54 = vector.shape_cast %33 : vector<1x256xi1> to vector<1x256xi1>
    %55 = vector.broadcast %54 : vector<1x256xi1> to vector<8x256xi1>
    %56 = arith.select %55, %52, %53 : vector<8x256xi1>, vector<8x256xbf16>
    %c2 = arith.constant 2 : index
    %c0_28 = arith.constant 0 : index
    %c0_29 = arith.constant 0 : index
    %57 = vector.load %arg4[%c2, %c0_28, %c0_29] : memref<9x8x8xbf16, #tpu.memory_space<vmem>>, vector<1x8x8xbf16>
    %58 = vector.shape_cast %57 : vector<1x8x8xbf16> to vector<8x8xbf16>
    %cst_30 = arith.constant dense<0.000000e+00> : vector<8x256xf32>
    %59 = tpu.matmul %58, %56, %cst_30 {dimension_numbers = #tpu.dot_dimension_numbers<[1], [0], [0], [1], [0, 0, 1, 1], [], []>} : vector<8x8xbf16>, vector<8x256xbf16>, vector<8x256xf32> -> vector<8x256xf32>
    %60 = arith.addf %50, %59 : vector<8x256xf32>
    %c0_31 = arith.constant 0 : index
    %c127 = arith.constant 127 : index
    %61 = vector.load %arg11[%c0_31, %c127] : memref<8x512xf32, #tpu.memory_space<vmem>>, vector<8x256xf32>
    %62 = arith.truncf %61 : vector<8x256xf32> to vector<8x256xbf16>
    %cst_32 = arith.constant 0.000000e+00 : bf16
    %63 = vector.broadcast %cst_32 : bf16 to vector<8x256xbf16>
    %64 = vector.shape_cast %31 : vector<1x256xi1> to vector<1x256xi1>
    %65 = vector.broadcast %64 : vector<1x256xi1> to vector<8x256xi1>
    %66 = arith.select %65, %62, %63 : vector<8x256xi1>, vector<8x256xbf16>
    %c3 = arith.constant 3 : index
    %c0_33 = arith.constant 0 : index
    %c0_34 = arith.constant 0 : index
    %67 = vector.load %arg4[%c3, %c0_33, %c0_34] : memref<9x8x8xbf16, #tpu.memory_space<vmem>>, vector<1x8x8xbf16>
    %68 = vector.shape_cast %67 : vector<1x8x8xbf16> to vector<8x8xbf16>
    %cst_35 = arith.constant dense<0.000000e+00> : vector<8x256xf32>
    %69 = tpu.matmul %68, %66, %cst_35 {dimension_numbers = #tpu.dot_dimension_numbers<[1], [0], [0], [1], [0, 0, 1, 1], [], []>} : vector<8x8xbf16>, vector<8x256xbf16>, vector<8x256xf32> -> vector<8x256xf32>
    %70 = arith.addf %60, %69 : vector<8x256xf32>
    %c0_36 = arith.constant 0 : index
    %c128_37 = arith.constant 128 : index
    %71 = vector.load %arg11[%c0_36, %c128_37] : memref<8x512xf32, #tpu.memory_space<vmem>>, vector<8x256xf32>
    %72 = arith.truncf %71 : vector<8x256xf32> to vector<8x256xbf16>
    %c4 = arith.constant 4 : index
    %c0_38 = arith.constant 0 : index
    %c0_39 = arith.constant 0 : index
    %73 = vector.load %arg4[%c4, %c0_38, %c0_39] : memref<9x8x8xbf16, #tpu.memory_space<vmem>>, vector<1x8x8xbf16>
    %74 = vector.shape_cast %73 : vector<1x8x8xbf16> to vector<8x8xbf16>
    %cst_40 = arith.constant dense<0.000000e+00> : vector<8x256xf32>
    %75 = tpu.matmul %74, %72, %cst_40 {dimension_numbers = #tpu.dot_dimension_numbers<[1], [0], [0], [1], [0, 0, 1, 1], [], []>} : vector<8x8xbf16>, vector<8x256xbf16>, vector<8x256xf32> -> vector<8x256xf32>
    %76 = arith.addf %70, %75 : vector<8x256xf32>
    %c0_41 = arith.constant 0 : index
    %c129 = arith.constant 129 : index
    %77 = vector.load %arg11[%c0_41, %c129] : memref<8x512xf32, #tpu.memory_space<vmem>>, vector<8x256xf32>
    %78 = arith.truncf %77 : vector<8x256xf32> to vector<8x256xbf16>
    %cst_42 = arith.constant 0.000000e+00 : bf16
    %79 = vector.broadcast %cst_42 : bf16 to vector<8x256xbf16>
    %80 = vector.shape_cast %33 : vector<1x256xi1> to vector<1x256xi1>
    %81 = vector.broadcast %80 : vector<1x256xi1> to vector<8x256xi1>
    %82 = arith.select %81, %78, %79 : vector<8x256xi1>, vector<8x256xbf16>
    %c5 = arith.constant 5 : index
    %c0_43 = arith.constant 0 : index
    %c0_44 = arith.constant 0 : index
    %83 = vector.load %arg4[%c5, %c0_43, %c0_44] : memref<9x8x8xbf16, #tpu.memory_space<vmem>>, vector<1x8x8xbf16>
    %84 = vector.shape_cast %83 : vector<1x8x8xbf16> to vector<8x8xbf16>
    %cst_45 = arith.constant dense<0.000000e+00> : vector<8x256xf32>
    %85 = tpu.matmul %84, %82, %cst_45 {dimension_numbers = #tpu.dot_dimension_numbers<[1], [0], [0], [1], [0, 0, 1, 1], [], []>} : vector<8x8xbf16>, vector<8x256xbf16>, vector<8x256xf32> -> vector<8x256xf32>
    %86 = arith.addf %76, %85 : vector<8x256xf32>
    %c0_46 = arith.constant 0 : index
    %c143 = arith.constant 143 : index
    %87 = vector.load %arg11[%c0_46, %c143] : memref<8x512xf32, #tpu.memory_space<vmem>>, vector<8x256xf32>
    %88 = arith.truncf %87 : vector<8x256xf32> to vector<8x256xbf16>
    %cst_47 = arith.constant 0.000000e+00 : bf16
    %89 = vector.broadcast %cst_47 : bf16 to vector<8x256xbf16>
    %90 = vector.shape_cast %31 : vector<1x256xi1> to vector<1x256xi1>
    %91 = vector.broadcast %90 : vector<1x256xi1> to vector<8x256xi1>
    %92 = arith.select %91, %88, %89 : vector<8x256xi1>, vector<8x256xbf16>
    %c6 = arith.constant 6 : index
    %c0_48 = arith.constant 0 : index
    %c0_49 = arith.constant 0 : index
    %93 = vector.load %arg4[%c6, %c0_48, %c0_49] : memref<9x8x8xbf16, #tpu.memory_space<vmem>>, vector<1x8x8xbf16>
    %94 = vector.shape_cast %93 : vector<1x8x8xbf16> to vector<8x8xbf16>
    %cst_50 = arith.constant dense<0.000000e+00> : vector<8x256xf32>
    %95 = tpu.matmul %94, %92, %cst_50 {dimension_numbers = #tpu.dot_dimension_numbers<[1], [0], [0], [1], [0, 0, 1, 1], [], []>} : vector<8x8xbf16>, vector<8x256xbf16>, vector<8x256xf32> -> vector<8x256xf32>
    %96 = arith.addf %86, %95 : vector<8x256xf32>
    %c0_51 = arith.constant 0 : index
    %c144 = arith.constant 144 : index
    %97 = vector.load %arg11[%c0_51, %c144] : memref<8x512xf32, #tpu.memory_space<vmem>>, vector<8x256xf32>
    %98 = arith.truncf %97 : vector<8x256xf32> to vector<8x256xbf16>
    %c7 = arith.constant 7 : index
    %c0_52 = arith.constant 0 : index
    %c0_53 = arith.constant 0 : index
    %99 = vector.load %arg4[%c7, %c0_52, %c0_53] : memref<9x8x8xbf16, #tpu.memory_space<vmem>>, vector<1x8x8xbf16>
    %100 = vector.shape_cast %99 : vector<1x8x8xbf16> to vector<8x8xbf16>
    %cst_54 = arith.constant dense<0.000000e+00> : vector<8x256xf32>
    %101 = tpu.matmul %100, %98, %cst_54 {dimension_numbers = #tpu.dot_dimension_numbers<[1], [0], [0], [1], [0, 0, 1, 1], [], []>} : vector<8x8xbf16>, vector<8x256xbf16>, vector<8x256xf32> -> vector<8x256xf32>
    %102 = arith.addf %96, %101 : vector<8x256xf32>
    %c0_55 = arith.constant 0 : index
    %c145 = arith.constant 145 : index
    %103 = vector.load %arg11[%c0_55, %c145] : memref<8x512xf32, #tpu.memory_space<vmem>>, vector<8x256xf32>
    %104 = arith.truncf %103 : vector<8x256xf32> to vector<8x256xbf16>
    %cst_56 = arith.constant 0.000000e+00 : bf16
    %105 = vector.broadcast %cst_56 : bf16 to vector<8x256xbf16>
    %106 = vector.shape_cast %33 : vector<1x256xi1> to vector<1x256xi1>
    %107 = vector.broadcast %106 : vector<1x256xi1> to vector<8x256xi1>
    %108 = arith.select %107, %104, %105 : vector<8x256xi1>, vector<8x256xbf16>
    %c8 = arith.constant 8 : index
    %c0_57 = arith.constant 0 : index
    %c0_58 = arith.constant 0 : index
    %109 = vector.load %arg4[%c8, %c0_57, %c0_58] : memref<9x8x8xbf16, #tpu.memory_space<vmem>>, vector<1x8x8xbf16>
    %110 = vector.shape_cast %109 : vector<1x8x8xbf16> to vector<8x8xbf16>
    %cst_59 = arith.constant dense<0.000000e+00> : vector<8x256xf32>
    %111 = tpu.matmul %110, %108, %cst_59 {dimension_numbers = #tpu.dot_dimension_numbers<[1], [0], [0], [1], [0, 0, 1, 1], [], []>} : vector<8x8xbf16>, vector<8x256xbf16>, vector<8x256xf32> -> vector<8x256xf32>
    %112 = arith.addf %102, %111 : vector<8x256xf32>
    %c0_60 = arith.constant 0 : index
    %c0_61 = arith.constant 0 : index
    %113 = vector.load %arg5[%c0_60, %c0_61] : memref<8x1xf32, #tpu.memory_space<vmem>>, vector<8x1xf32>
    %114 = vector.broadcast %113 : vector<8x1xf32> to vector<8x256xf32>
    %115 = arith.addf %112, %114 : vector<8x256xf32>
    %cst_62 = arith.constant 0.000000e+00 : f32
    %116 = vector.broadcast %cst_62 : f32 to vector<8x256xf32>
    %117 = arith.maximumf %115, %116 : vector<8x256xf32>
    %118 = arith.truncf %117 : vector<8x256xf32> to vector<8x256xbf16>
    %c0_63 = arith.constant 0 : index
    %c0_64 = arith.constant 0 : index
    %119 = vector.load %arg6[%c0_63, %c0_64] : memref<32x8xbf16, #tpu.memory_space<vmem>>, vector<32x8xbf16>
    %cst_65 = arith.constant dense<0.000000e+00> : vector<32x256xf32>
    %120 = tpu.matmul %119, %118, %cst_65 {dimension_numbers = #tpu.dot_dimension_numbers<[1], [0], [0], [1], [0, 0, 1, 1], [], []>} : vector<32x8xbf16>, vector<8x256xbf16>, vector<32x256xf32> -> vector<32x256xf32>
    %c0_66 = arith.constant 0 : index
    %c0_67 = arith.constant 0 : index
    %121 = vector.load %arg7[%c0_66, %c0_67] : memref<32x1xf32, #tpu.memory_space<vmem>>, vector<32x1xf32>
    %122 = vector.broadcast %121 : vector<32x1xf32> to vector<32x256xf32>
    %123 = arith.addf %120, %122 : vector<32x256xf32>
    %cst_68 = arith.constant dense<0.000000e+00> : vector<32xf32>
    %124 = vector.multi_reduction <add>, %123, %cst_68 [1] : vector<32x256xf32> to vector<32xf32>
    %125 = vector.shape_cast %124 : vector<32xf32> to vector<32x1xf32>
    %cst_69 = arith.constant 3.906250e-03 : f32
    %126 = vector.broadcast %cst_69 : f32 to vector<32x1xf32>
    %127 = arith.mulf %125, %126 : vector<32x1xf32>
    %c0_70 = arith.constant 0 : index
    %c0_71 = arith.constant 0 : index
    %128 = vector.load %arg8[%c0_70, %c0_71] : memref<32x8xf32, #tpu.memory_space<vmem>>, vector<32x8xf32>
    %129 = vector.broadcast %127 : vector<32x1xf32> to vector<32x8xf32>
    %130 = arith.mulf %128, %129 : vector<32x8xf32>
    %cst_72 = arith.constant dense<0.000000e+00> : vector<8xf32>
    %131 = vector.multi_reduction <add>, %130, %cst_72 [0] : vector<32x8xf32> to vector<8xf32>
    %132 = vector.shape_cast %131 : vector<8xf32> to vector<1x8xf32>
    %cst_73 = arith.constant 0.000000e+00 : f32
    %133 = vector.broadcast %cst_73 : f32 to vector<1x8xf32>
    %134 = arith.maximumf %132, %133 : vector<1x8xf32>
    %c0_74 = arith.constant 0 : index
    %c0_75 = arith.constant 0 : index
    %135 = vector.load %arg9[%c0_74, %c0_75] : memref<32x8xf32, #tpu.memory_space<vmem>>, vector<32x8xf32>
    %136 = vector.broadcast %134 : vector<1x8xf32> to vector<32x8xf32>
    %137 = arith.mulf %135, %136 : vector<32x8xf32>
    %cst_76 = arith.constant dense<0.000000e+00> : vector<32xf32>
    %138 = vector.multi_reduction <add>, %137, %cst_76 [1] : vector<32x8xf32> to vector<32xf32>
    %139 = vector.shape_cast %138 : vector<32xf32> to vector<32x1xf32>
    %cst_77 = arith.constant 0.000000e+00 : f32
    %140 = vector.broadcast %cst_77 : f32 to vector<32x1xf32>
    %141 = arith.subf %140, %139 : vector<32x1xf32>
    %142 = math.exp %141 : vector<32x1xf32>
    %cst_78 = arith.constant 1.000000e+00 : f32
    %143 = vector.broadcast %cst_78 : f32 to vector<32x1xf32>
    %144 = arith.addf %143, %142 : vector<32x1xf32>
    %cst_79 = arith.constant 1.000000e+00 : f32
    %145 = vector.broadcast %cst_79 : f32 to vector<32x1xf32>
    %146 = arith.divf %145, %144 : vector<32x1xf32>
    %147 = vector.broadcast %146 : vector<32x1xf32> to vector<32x256xf32>
    %148 = arith.mulf %123, %147 : vector<32x256xf32>
    %149 = arith.addf %148, %1 : vector<32x256xf32>
    %cst_80 = arith.constant 0.000000e+00 : f32
    %150 = vector.broadcast %cst_80 : f32 to vector<32x256xf32>
    %151 = arith.maximumf %149, %150 : vector<32x256xf32>
    %c0_81 = arith.constant 0 : index
    %c0_82 = arith.constant 0 : index
    %c0_83 = arith.constant 0 : index
    %152 = vector.load %arg10[%c0_81, %c0_82, %c0_83] : memref<1x32x256xf32, #tpu.memory_space<vmem>>, vector<1x32x256xf32>
    %153 = vector.shape_cast %152 : vector<1x32x256xf32> to vector<32x256xf32>
    %154 = vector.shape_cast %151 : vector<32x256xf32> to vector<1x32x256xf32>
    tpu.vector_store %arg10[%c0_81, %c0_82, %c0_83], %154 {strides = array<i32>} : memref<1x32x256xf32, #tpu.memory_space<vmem>>, vector<1x32x256xf32>,
    return
  }
  func.func @transform_0(%arg0: i32) -> (i32, i32, i32) {
    %c0_i32 = arith.constant 0 : i32
    %c0_i32_0 = arith.constant 0 : i32
    %c0_i32_1 = arith.constant 0 : i32
    return %arg0, %c0_i32, %c0_i32_0 : i32, i32, i32
  }
  func.func @transform_1(%arg0: i32) -> (i32, i32) {
    %c0_i32 = arith.constant 0 : i32
    %c0_i32_0 = arith.constant 0 : i32
    %c0_i32_1 = arith.constant 0 : i32
    return %c0_i32, %c0_i32_0 : i32, i32
  }
  func.func @transform_2(%arg0: i32) -> (i32, i32) {
    %c0_i32 = arith.constant 0 : i32
    %c0_i32_0 = arith.constant 0 : i32
    %c0_i32_1 = arith.constant 0 : i32
    return %c0_i32, %c0_i32_0 : i32, i32
  }
  func.func @transform_3(%arg0: i32) -> (i32, i32, i32) {
    %c0_i32 = arith.constant 0 : i32
    %c0_i32_0 = arith.constant 0 : i32
    %c0_i32_1 = arith.constant 0 : i32
    %c0_i32_2 = arith.constant 0 : i32
    return %c0_i32, %c0_i32_0, %c0_i32_1 : i32, i32, i32
  }
  func.func @transform_4(%arg0: i32) -> (i32, i32) {
    %c0_i32 = arith.constant 0 : i32
    %c0_i32_0 = arith.constant 0 : i32
    %c0_i32_1 = arith.constant 0 : i32
    return %c0_i32, %c0_i32_0 : i32, i32
  }
  func.func @transform_5(%arg0: i32) -> (i32, i32) {
    %c0_i32 = arith.constant 0 : i32
    %c0_i32_0 = arith.constant 0 : i32
    %c0_i32_1 = arith.constant 0 : i32
    return %c0_i32, %c0_i32_0 : i32, i32
  }
  func.func @transform_6(%arg0: i32) -> (i32, i32) {
    %c0_i32 = arith.constant 0 : i32
    %c0_i32_0 = arith.constant 0 : i32
    %c0_i32_1 = arith.constant 0 : i32
    return %c0_i32, %c0_i32_0 : i32, i32
  }
  func.func @transform_7(%arg0: i32) -> (i32, i32) {
    %c0_i32 = arith.constant 0 : i32
    %c0_i32_0 = arith.constant 0 : i32
    %c0_i32_1 = arith.constant 0 : i32
    return %c0_i32, %c0_i32_0 : i32, i32
  }
  func.func @transform_8(%arg0: i32) -> (i32, i32) {
    %c0_i32 = arith.constant 0 : i32
    %c0_i32_0 = arith.constant 0 : i32
    %c0_i32_1 = arith.constant 0 : i32
    return %c0_i32, %c0_i32_0 : i32, i32
  }
  func.func @transform_9(%arg0: i32) -> (i32, i32, i32) {
    %c0_i32 = arith.constant 0 : i32
    %c0_i32_0 = arith.constant 0 : i32
    %c0_i32_1 = arith.constant 0 : i32
    return %arg0, %c0_i32, %c0_i32_0 : i32, i32, i32
  }
}

</mosaic_0001>

<llo_original>
// kernel: tpu_custom_call.1
$region0: #{tpu_custom_call.1}
  #allocation0 [shape = 'u32[]', space=smem, size = 0x4, offset = 0x4, fixed_abs, tag = 'smem constant byte address 0x4 - core index']
  #allocation1 [shape = 'u32[72,128]{1,0:T(1,128)}', space=vmem, size = 0x9000, scoped, tag = 'internal scratch']
  #allocation2 [shape = 'f32[8,512]{1,0:T(8,128)}', space=vmem, size = 0x4000, scoped, tag = 'scratch operand']
  %s0 = inlined_call_operand.hbm [shape: f32[2,32,256], index: 0, kind: input, shape index: {}]
  %s1 = inlined_call_operand.vmem [shape: bf16[8,32], index: 1, kind: input, shape index: {}]
  %s2 = inlined_call_operand.vmem [shape: f32[8,1], index: 2, kind: input, shape index: {}]
  %s3 = inlined_call_operand.vmem [shape: bf16[9,8,8], index: 3, kind: input, shape index: {}]
  %s4 = inlined_call_operand.vmem [shape: f32[8,1], index: 4, kind: input, shape index: {}]
  %s5 = inlined_call_operand.vmem [shape: bf16[32,8], index: 5, kind: input, shape index: {}]
  %s6 = inlined_call_operand.vmem [shape: f32[32,1], index: 6, kind: input, shape index: {}]
  %s7 = inlined_call_operand.vmem [shape: f32[32,8], index: 7, kind: input, shape index: {}]
  %s8 = inlined_call_operand.vmem [shape: f32[32,8], index: 8, kind: input, shape index: {}]
  %s9 = inlined_call_operand.hbm [shape: f32[2,32,256], index: 9, kind: output, shape index: {}]
  %s10 = sld [smem:[#allocation0]]
  $region73: #{tpu_custom_call.1} parent=0
    _
  %s12 = ssub.s32 1, %s10
  %s13 = scalar_select 0, %s12, %s10
  $region1: #{tpu_custom_call.1} parent=0
    #allocation3 [shape = 'u8[65536]{0}', space=vmem, size = 0x10000, scoped, tag = 'input window, operand 0']
    #allocation4 [shape = 's32[2]{0}', space=sflag, size = 0x8, scoped, tag = 'scoped memory for tpu_custom_call.1']
    #allocation5 [shape = 's32[2]{0}', space=sflag, size = 0x8, scoped, tag = 'scoped memory for tpu_custom_call.1']
    #allocation6 [shape = 'u8[65536]{0}', space=vmem, size = 0x10000, scoped, tag = 'output window, operand 0']
    %14 = vsyncpa [#allocation4], 0
    %s15 = scalar_lea.sflag [#allocation4], 1
    %16 = vsyncpa %s15, 0
    %17 = vsyncpa [#allocation5], 0
    %s18 = scalar_lea.sflag [#allocation5], 1
    %19 = vsyncpa %s18, 0
    loop: start=0, step=1, limit=4
    $region2: #{tpu_custom_call.1} parent=1 // loop_pre_header
      _
    $region3: #{tpu_custom_call.1} parent=1 // loop_header
      %s21 = sphi 0, %s25
      %p22 = scmp.ge.s32.totalorder %s21, 4
      %s31 = sphi 0, %s33
      %s34 = sphi 0, %s31
      %s35 = sphi 0, %s34
      %s51 = sphi 0, %s35
      %s55 = sphi 0, %s55
      %s57 = sphi 0, %s55
      %s58 = sphi 0, %s57
      %s72 = sphi 0, %s58
      %s76 = sphi 0, %s76
      %s78 = sphi 0, %s76
      %s79 = sphi 0, %s78
      %s93 = sphi 0, %s79
      %s97 = sphi 0, %s97
      %s99 = sphi 0, %s97
      %s100 = sphi 0, %s99
      %s114 = sphi 0, %s100
      %s118 = sphi 0, %s118
      %s120 = sphi 0, %s118
      %s121 = sphi 0, %s120
      %s135 = sphi 0, %s121
      %s139 = sphi 0, %s139
      %s141 = sphi 0, %s139
      %s142 = sphi 0, %s141
      %s156 = sphi 0, %s142
      %s160 = sphi 0, %s160
      %s162 = sphi 0, %s160
      %s163 = sphi 0, %s162
      %s177 = sphi 0, %s163
      %s181 = sphi 0, %s181
      %s183 = sphi 0, %s181
      %s184 = sphi 0, %s183
      %s198 = sphi 0, %s184
      %s202 = sphi 0, %s202
      %s204 = sphi 0, %s202
      %s205 = sphi 0, %s204
      %s219 = sphi 0, %s205
      %s225 = sphi 0, %s227
      %s228 = sphi 0, %s225
      %s229 = sphi 0, %s228
      %s245 = sphi 0, %s229
    $region4: #{tpu_custom_call.1} parent=1 // loop_header_branch
      %24 = sbr.rel (%p22) target = $region8
    $region5: #{tpu_custom_call.1} parent=1 // loop_body
      %s26 = ssub.s32 %s21, 1
      %s27 = ssub.s32 %s21, 2
      %s28 = sadd.s32 %s21, 1
      %s29 = ssub.s32 %s21, %s28
      %p30 = scmp.eq.s32.totalorder %s29, 0
      %s32 = sadd.s32 %s31, 1
      %s33 = scalar_select %p30, %s31, %s32
      %p36 = pneg %p30
      %p37 = scmp.eq.s32.totalorder %s21, 1
      %p38 = por %p36, %p37
      %p39 = scmp.ne.s32.totalorder %s31, %s34
      %p40 = scmp.eq.s32.totalorder %s21, 0
      %p41 = por %p39, %p40
      %p42 = scmp.ne.s32.totalorder %s31, %s34
      %p43 = scmp.eq.s32.totalorder %s26, 1
      %p44 = por %p42, %p43
      %p45 = scmp.ne.s32.totalorder %s34, %s35
      %p46 = scmp.eq.s32.totalorder %s26, 0
      %p47 = por %p45, %p46
      %p48 = scmp.ne.s32.totalorder %s34, %s35
      %p49 = scmp.eq.s32.totalorder %s27, 1
      %p50 = por %p48, %p49
      %p52 = scmp.ne.s32.totalorder %s35, %s51
      %p53 = scmp.eq.s32.totalorder %s27, 0
      %p54 = por %p52, %p53
      %s56 = sadd.s32 %s55, 1
      %p59 = scmp.eq.s32.totalorder %s21, 1
      %p60 = scmp.ne.s32.totalorder %s55, %s57
      %p61 = scmp.eq.s32.totalorder %s21, 0
      %p62 = por %p60, %p61
      %p63 = scmp.ne.s32.totalorder %s55, %s57
      %p64 = scmp.eq.s32.totalorder %s26, 1
      %p65 = por %p63, %p64
      %p66 = scmp.ne.s32.totalorder %s57, %s58
      %p67 = scmp.eq.s32.totalorder %s26, 0
      %p68 = por %p66, %p67
      %p69 = scmp.ne.s32.totalorder %s57, %s58
      %p70 = scmp.eq.s32.totalorder %s27, 1
      %p71 = por %p69, %p70
      %p73 = scmp.ne.s32.totalorder %s58, %s72
      %p74 = scmp.eq.s32.totalorder %s27, 0
      %p75 = por %p73, %p74
      %s77 = sadd.s32 %s76, 1
      %p80 = scmp.eq.s32.totalorder %s21, 1
      %p81 = scmp.ne.s32.totalorder %s76, %s78
      %p82 = scmp.eq.s32.totalorder %s21, 0
      %p83 = por %p81, %p82
      %p84 = scmp.ne.s32.totalorder %s76, %s78
      %p85 = scmp.eq.s32.totalorder %s26, 1
      %p86 = por %p84, %p85
      %p87 = scmp.ne.s32.totalorder %s78, %s79
      %p88 = scmp.eq.s32.totalorder %s26, 0
      %p89 = por %p87, %p88
      %p90 = scmp.ne.s32.totalorder %s78, %s79
      %p91 = scmp.eq.s32.totalorder %s27, 1
      %p92 = por %p90, %p91
      %p94 = scmp.ne.s32.totalorder %s79, %s93
      %p95 = scmp.eq.s32.totalorder %s27, 0
      %p96 = por %p94, %p95
      %s98 = sadd.s32 %s97, 1
      %p101 = scmp.eq.s32.totalorder %s21, 1
      %p102 = scmp.ne.s32.totalorder %s97, %s99
      %p103 = scmp.eq.s32.totalorder %s21, 0
      %p104 = por %p102, %p103
      %p105 = scmp.ne.s32.totalorder %s97, %s99
      %p106 = scmp.eq.s32.totalorder %s26, 1
      %p107 = por %p105, %p106
      %p108 = scmp.ne.s32.totalorder %s99, %s100
      %p109 = scmp.eq.s32.totalorder %s26, 0
      %p110 = por %p108, %p109
      %p111 = scmp.ne.s32.totalorder %s99, %s100
      %p112 = scmp.eq.s32.totalorder %s27, 1
      %p113 = por %p111, %p112
      %p115 = scmp.ne.s32.totalorder %s100, %s114
      %p116 = scmp.eq.s32.totalorder %s27, 0
      %p117 = por %p115, %p116
      %s119 = sadd.s32 %s118, 1
      %p122 = scmp.eq.s32.totalorder %s21, 1
      %p123 = scmp.ne.s32.totalorder %s118, %s120
      %p124 = scmp.eq.s32.totalorder %s21, 0
      %p125 = por %p123, %p124
      %p126 = scmp.ne.s32.totalorder %s118, %s120
      %p127 = scmp.eq.s32.totalorder %s26, 1
      %p128 = por %p126, %p127
      %p129 = scmp.ne.s32.totalorder %s120, %s121
      %p130 = scmp.eq.s32.totalorder %s26, 0
      %p131 = por %p129, %p130
      %p132 = scmp.ne.s32.totalorder %s120, %s121
      %p133 = scmp.eq.s32.totalorder %s27, 1
      %p134 = por %p132, %p133
      %p136 = scmp.ne.s32.totalorder %s121, %s135
      %p137 = scmp.eq.s32.totalorder %s27, 0
      %p138 = por %p136, %p137
      %s140 = sadd.s32 %s139, 1
      %p143 = scmp.eq.s32.totalorder %s21, 1
      %p144 = scmp.ne.s32.totalorder %s139, %s141
      %p145 = scmp.eq.s32.totalorder %s21, 0
      %p146 = por %p144, %p145
      %p147 = scmp.ne.s32.totalorder %s139, %s141
      %p148 = scmp.eq.s32.totalorder %s26, 1
      %p149 = por %p147, %p148
      %p150 = scmp.ne.s32.totalorder %s141, %s142
      %p151 = scmp.eq.s32.totalorder %s26, 0
      %p152 = por %p150, %p151
      %p153 = scmp.ne.s32.totalorder %s141, %s142
      %p154 = scmp.eq.s32.totalorder %s27, 1
      %p155 = por %p153, %p154
      %p157 = scmp.ne.s32.totalorder %s142, %s156
      %p158 = scmp.eq.s32.totalorder %s27, 0
      %p159 = por %p157, %p158
      %s161 = sadd.s32 %s160, 1
      %p164 = scmp.eq.s32.totalorder %s21, 1
      %p165 = scmp.ne.s32.totalorder %s160, %s162
      %p166 = scmp.eq.s32.totalorder %s21, 0
      %p167 = por %p165, %p166
      %p168 = scmp.ne.s32.totalorder %s160, %s162
      %p169 = scmp.eq.s32.totalorder %s26, 1
      %p170 = por %p168, %p169
      %p171 = scmp.ne.s32.totalorder %s162, %s163
      %p172 = scmp.eq.s32.totalorder %s26, 0
      %p173 = por %p171, %p172
      %p174 = scmp.ne.s32.totalorder %s162, %s163
      %p175 = scmp.eq.s32.totalorder %s27, 1
      %p176 = por %p174, %p175
      %p178 = scmp.ne.s32.totalorder %s163, %s177
      %p179 = scmp.eq.s32.totalorder %s27, 0
      %p180 = por %p178, %p179
      %s182 = sadd.s32 %s181, 1
      %p185 = scmp.eq.s32.totalorder %s21, 1
      %p186 = scmp.ne.s32.totalorder %s181, %s183
      %p187 = scmp.eq.s32.totalorder %s21, 0
      %p188 = por %p186, %p187
      %p189 = scmp.ne.s32.totalorder %s181, %s183
      %p190 = scmp.eq.s32.totalorder %s26, 1
      %p191 = por %p189, %p190
      %p192 = scmp.ne.s32.totalorder %s183, %s184
      %p193 = scmp.eq.s32.totalorder %s26, 0
      %p194 = por %p192, %p193
      %p195 = scmp.ne.s32.totalorder %s183, %s184
      %p196 = scmp.eq.s32.totalorder %s27, 1
      %p197 = por %p195, %p196
      %p199 = scmp.ne.s32.totalorder %s184, %s198
      %p200 = scmp.eq.s32.totalorder %s27, 0
      %p201 = por %p199, %p200
      %s203 = sadd.s32 %s202, 1
      %p206 = scmp.eq.s32.totalorder %s21, 1
      %p207 = scmp.ne.s32.totalorder %s202, %s204
      %p208 = scmp.eq.s32.totalorder %s21, 0
      %p209 = por %p207, %p208
      %p210 = scmp.ne.s32.totalorder %s202, %s204
      %p211 = scmp.eq.s32.totalorder %s26, 1
      %p212 = por %p210, %p211
      %p213 = scmp.ne.s32.totalorder %s204, %s205
      %p214 = scmp.eq.s32.totalorder %s26, 0
      %p215 = por %p213, %p214
      %p216 = scmp.ne.s32.totalorder %s204, %s205
      %p217 = scmp.eq.s32.totalorder %s27, 1
      %p218 = por %p216, %p217
      %p220 = scmp.ne.s32.totalorder %s205, %s219
      %p221 = scmp.eq.s32.totalorder %s27, 0
      %p222 = por %p220, %p221
      %s223 = ssub.s32 %s21, %s28
      %p224 = scmp.eq.s32.totalorder %s223, 0
      %s226 = sadd.s32 %s225, 1
      %s227 = scalar_select %p224, %s225, %s226
      %p230 = pneg %p224
      %p231 = scmp.eq.s32.totalorder %s21, 1
      %p232 = por %p230, %p231
      %p233 = scmp.ne.s32.totalorder %s225, %s228
      %p234 = scmp.eq.s32.totalorder %s21, 0
      %p235 = por %p233, %p234
      %p236 = scmp.ne.s32.totalorder %s225, %s228
      %p237 = scmp.eq.s32.totalorder %s26, 1
      %p238 = por %p236, %p237
      %p239 = scmp.ne.s32.totalorder %s228, %s229
      %p240 = scmp.eq.s32.totalorder %s26, 0
      %p241 = por %p239, %p240
      %p242 = scmp.ne.s32.totalorder %s228, %s229
      %p243 = scmp.eq.s32.totalorder %s27, 1
      %p244 = por %p242, %p243
      %p246 = scmp.ne.s32.totalorder %s229, %s245
      %p247 = scmp.eq.s32.totalorder %s27, 0
      %p248 = por %p246, %p247
      %p249 = scmp.le.s32.totalorder 1, %s21
      %p250 = scmp.lt.s32.totalorder %s21, 3
      %p251 = pnand %p249, %p250
      %p252 = pneg %p251
      // Predicated region
      $region9: #{tpu_custom_call.1} parent=5 // pred_check
        _
      $region10: #{tpu_custom_call.1} parent=5 // pred_check_branch
        %254 = sbr.rel (%p251) target = $region12
      $region11: #{tpu_custom_call.1} parent=5 // pred_region
        %s255 = ssub.s32 %s21, 1
        // Predicated region
        $region13: #{tpu_custom_call.1} parent=11 // pred_check
          %p256 = pneg %p68
        $region14: #{tpu_custom_call.1} parent=11 // pred_check_branch
          %258 = sbr.rel (%p256) target = $region16
        $region15: #{tpu_custom_call.1} parent=11 // pred_region
          _
        $region16: #{tpu_custom_call.1} parent=11 // pred_fallthru
          _
        // Predicated region
        $region17: #{tpu_custom_call.1} parent=11 // pred_check
          %p259 = pneg %p89
        $region18: #{tpu_custom_call.1} parent=11 // pred_check_branch
          %261 = sbr.rel (%p259) target = $region20
        $region19: #{tpu_custom_call.1} parent=11 // pred_region
          _
        $region20: #{tpu_custom_call.1} parent=11 // pred_fallthru
          _
        // Predicated region
        $region21: #{tpu_custom_call.1} parent=11 // pred_check
          %p262 = pneg %p110
        $region22: #{tpu_custom_call.1} parent=11 // pred_check_branch
          %264 = sbr.rel (%p262) target = $region24
        $region23: #{tpu_custom_call.1} parent=11 // pred_region
          _
        $region24: #{tpu_custom_call.1} parent=11 // pred_fallthru
          _
        // Predicated region
        $region25: #{tpu_custom_call.1} parent=11 // pred_check
          %p265 = pneg %p131
        $region26: #{tpu_custom_call.1} parent=11 // pred_check_branch
          %267 = sbr.rel (%p265) target = $region28
        $region27: #{tpu_custom_call.1} parent=11 // pred_region
          _
        $region28: #{tpu_custom_call.1} parent=11 // pred_fallthru
          _
        // Predicated region
        $region29: #{tpu_custom_call.1} parent=11 // pred_check
          %p268 = pneg %p152
        $region30: #{tpu_custom_call.1} parent=11 // pred_check_branch
          %270 = sbr.rel (%p268) target = $region32
        $region31: #{tpu_custom_call.1} parent=11 // pred_region
          _
        $region32: #{tpu_custom_call.1} parent=11 // pred_fallthru
          _
        // Predicated region
        $region33: #{tpu_custom_call.1} parent=11 // pred_check
          %p271 = pneg %p173
        $region34: #{tpu_custom_call.1} parent=11 // pred_check_branch
          %273 = sbr.rel (%p271) target = $region36
        $region35: #{tpu_custom_call.1} parent=11 // pred_region
          _
        $region36: #{tpu_custom_call.1} parent=11 // pred_fallthru
          _
        // Predicated region
        $region37: #{tpu_custom_call.1} parent=11 // pred_check
          %p274 = pneg %p194
        $region38: #{tpu_custom_call.1} parent=11 // pred_check_branch
          %276 = sbr.rel (%p274) target = $region40
        $region39: #{tpu_custom_call.1} parent=11 // pred_region
          _
        $region40: #{tpu_custom_call.1} parent=11 // pred_fallthru
          _
        // Predicated region
        $region41: #{tpu_custom_call.1} parent=11 // pred_check
          %p277 = pneg %p215
        $region42: #{tpu_custom_call.1} parent=11 // pred_check_branch
          %279 = sbr.rel (%p277) target = $region44
        $region43: #{tpu_custom_call.1} parent=11 // pred_region
          _
        $region44: #{tpu_custom_call.1} parent=11 // pred_fallthru
          _
      $region12: #{tpu_custom_call.1} parent=5 // pred_fallthru
        _
      %p280 = scmp.lt.s32.totalorder %s21, 2
      // Predicated region
      $region45: #{tpu_custom_call.1} parent=5 // pred_check
        %p281 = pneg %p280
      $region46: #{tpu_custom_call.1} parent=5 // pred_check_branch
        %283 = sbr.rel (%p281) target = $region48
      $region47: #{tpu_custom_call.1} parent=5 // pred_region
        // Predicated region
        $region49: #{tpu_custom_call.1} parent=47 // pred_check
          %p284 = pneg %p41
        $region50: #{tpu_custom_call.1} parent=47 // pred_check_branch
          %286 = sbr.rel (%p284) target = $region52
        $region51: #{tpu_custom_call.1} parent=47 // pred_region
          %s287 = sand.u32 %s31, 1
          %s288 = scalar_lea.sflag [#allocation4], %s287
          %s289 = sand.u32 %s31, 1
          %s290 = smul.addr %s289, 64
          %s291 = scalar_lea.vmem [#allocation3], %s290
          %293 = vsyncadd %s288, 0
          %s294 = smul.addr %s21, 8
          %s295 = smul.addr %s294, 8
          %s296 = scalar_lea.hbm %s0, %s295
          %s297 = sshll.u32 %s296, 4
          %s298 = int_to_ptr.hbm [resolvable:$true] %s297
          %s299 = sshll.u32 %s291, 4
          %s300 = int_to_ptr.vmem [resolvable:$true] %s299
          %305 = dma.hbm_to_vmem [thread:$0]  %s298, 1024, %s300, %s288, 256, 256, 16
        $region52: #{tpu_custom_call.1} parent=47 // pred_fallthru
          _
      $region48: #{tpu_custom_call.1} parent=5 // pred_fallthru
        _
      %p306 = scmp.le.s32.totalorder 1, %s21
      %p307 = scmp.lt.s32.totalorder %s21, 3
      %p308 = pnand %p306, %p307
      %p309 = pneg %p308
      // Predicated region
      $region53: #{tpu_custom_call.1} parent=5 // pred_check
        _
      $region54: #{tpu_custom_call.1} parent=5 // pred_check_branch
        %311 = sbr.rel (%p308) target = $region56
      $region55: #{tpu_custom_call.1} parent=5 // pred_region
        %s312 = ssub.s32 %s21, 1
        %s313 = sand.u32 %s34, 1
        %s314 = scalar_lea.sflag [#allocation4], %s313
        %s315 = sand.u32 %s34, 1
        %s316 = smul.addr %s315, 64
        %s317 = scalar_lea.vmem [#allocation3], %s316
        // Predicated region
        $region57: #{tpu_custom_call.1} parent=55 // pred_check
          %p318 = pneg %p47
        $region58: #{tpu_custom_call.1} parent=55 // pred_check_branch
          %320 = sbr.rel (%p318) target = $region60
        $region59: #{tpu_custom_call.1} parent=55 // pred_region
          %322 = dma.done %s314, 1024
        $region60: #{tpu_custom_call.1} parent=55 // pred_fallthru
          _
        %s323 = sand.u32 %s34, 1
        %s324 = scalar_lea.sflag [#allocation4], %s323
        %s325 = sand.u32 %s34, 1
        %s326 = smul.addr %s325, 64
        %s327 = scalar_lea.vmem [#allocation3], %s326
        %p328 = pneg %p47
        %p329 = pneg %p44
        %p330 = pneg %p68
        %p331 = pneg %p65
        %p332 = pneg %p89
        %p333 = pneg %p86
        %p334 = pneg %p110
        %p335 = pneg %p107
        %p336 = pneg %p131
        %p337 = pneg %p128
        %p338 = pneg %p152
        %p339 = pneg %p149
        %p340 = pneg %p173
        %p341 = pneg %p170
        %p342 = pneg %p194
        %p343 = pneg %p191
        %p344 = pneg %p215
        %p345 = pneg %p212
        %p346 = pneg %p241
        %p347 = pneg %p238
        %s348 = sand.u32 %s228, 1
        %s349 = scalar_lea.sflag [#allocation5], %s348
        %s350 = sand.u32 %s228, 1
        %s351 = smul.addr %s350, 64
        %s352 = scalar_lea.vmem [#allocation6], %s351
        %v356 = vld [vmem:[%s317] sm:$0xff]
        %v357 = vld [vmem:[%s317 + $0x8] sm:$0xff]
        %v358 = vld [vmem:[%s317 + $0x10] sm:$0xff]
        %v359 = vld [vmem:[%s317 + $0x18] sm:$0xff]
        %v360 = vld [vmem:[%s317 + $0x20] sm:$0xff]
        %v361 = vld [vmem:[%s317 + $0x28] sm:$0xff]
        %v362 = vld [vmem:[%s317 + $0x30] sm:$0xff]
        %v363 = vld [vmem:[%s317 + $0x38] sm:$0xff]
        %v364 = vpack.c.bf16 %v358, %v356
        %v365 = vpack.c.bf16 %v359, %v357
        %v366 = vpack.c.bf16 %v362, %v360
        %v367 = vpack.c.bf16 %v363, %v361
        %v368 = vld [vmem:[%s1] sm:$0xf]
        %v369 = vld [vmem:[%s2] sm:$0xff]
        %371 = vset.pattern.permute.xlu0 0
        %372 = vperm.xlu0 %371, %v369
        %v373 = vpop.permute.xlu0 %372
        %vm375 = vcmask 261120
        %v377 = vsel %vm375, %v368, 0
        %379 = vmatpush.bf16.msra.mxu0 0
        %380 = vmatpush.bf16.msra.mxu0 0
        %381 = vmatpush.bf16.msra.mxu0 0
        %382 = vmatpush.bf16.msra.mxu0 0
        %383 = vmatpush.bf16.msra.mxu0 0
        %384 = vmatpush.bf16.msra.mxu0 0
        %385 = vmatpush.bf16.msra.mxu0 %v366
        %386 = vmatpush.bf16.msra.mxu0 %v364
        %387 = vmatmul.bf16.gmra.mxu0 %v377
        %v388 = vpop.f32.mrf.mxu0
        %v389 = vadd.f32 %v373, %v388
        %v390 = vpop.f32.mrf.mxu0
        %391 = vdwg.mxu0
        %392 = vmatpush.bf16.msra.mxu0 0
        %393 = vmatpush.bf16.msra.mxu0 0
        %394 = vmatpush.bf16.msra.mxu0 0
        %395 = vmatpush.bf16.msra.mxu0 0
        %396 = vmatpush.bf16.msra.mxu0 0
        %397 = vmatpush.bf16.msra.mxu0 0
        %398 = vmatpush.bf16.msra.mxu0 %v367
        %399 = vmatpush.bf16.msra.mxu0 %v365
        %400 = vmatmul.bf16.gmra.mxu0 %v377
        %v401 = vpop.f32.mrf.mxu0
        %v402 = vadd.f32 %v373, %v401
        %v403 = vpop.f32.mrf.mxu0
        %404 = vdwg.mxu0
        %v405 = vmax.f32 %v389, 0.0
        %v406 = vmax.f32 %v402, 0.0
        %407 = vst [vmem:[#allocation2] sm:$0xff] 0.0
        %408 = vst [vmem:[#allocation2 + $0x8] sm:$0xff] 0.0
        %409 = vst [vmem:[#allocation2 + $0x10] sm:$0xff] 0.0
        %410 = vst [vmem:[#allocation2 + $0x18] sm:$0xff] 0.0
        %411 = vst [vmem:[#allocation2 + $0x8] sm:$0xff] %v405
        %412 = vst [vmem:[#allocation2 + $0x10] sm:$0xff] %v406
        %v413 = vlaneseq
        %v414 = vand.u32 %v413, 127
        %v415 = vadd.s32 %v414, 128
        %vm416 = vcmp.lt.s32.totalorder %v414, 0
        %v417 = vsub.s32 0, %v414
        %v418 = vsel %vm416, %v417, %v414
        %v419 = vshrl.u32 %v418, 4
        %v420 = vand.u32 %v418, 15
        %v421 = vsub.s32 0, %v420
        %v422 = vsel %vm416, %v421, %v420
        %vm423 = vcmp.lt.s32.totalorder %v415, 0
        %v424 = vsub.s32 0, %v415
        %v425 = vsel %vm423, %v424, %v415
        %v426 = vshrl.u32 %v425, 4
        %v427 = vand.u32 %v425, 15
        %v428 = vsub.s32 0, %v427
        %v429 = vsel %vm423, %v428, %v427
        %vm430 = vcmp.ne.s32.totalorder %v422, 0
        %vm431 = vcmp.ne.s32.totalorder %v429, 0
        %vm432 = vcmp.lt.s32.totalorder %v422, 0
        %vm433 = vcmp.lt.s32.totalorder %v429, 0
        %vm434 = vmand %vm432, %vm430
        %vm435 = vmand %vm433, %vm431
        %v436 = vadd.s32 %v422, 16
        %v437 = vadd.s32 %v429, 16
        %v438 = vsel %vm434, %v436, %v422
        %v439 = vsel %vm435, %v437, %v429
        %vm440 = vcmp.ne.s32.totalorder %v438, 0
        %vm441 = vcmp.ne.s32.totalorder %v439, 0
        %vm442 = vcmp.ne.s32.totalorder %v438, 15
        %vm443 = vcmp.ne.s32.totalorder %v439, 15
        %v444 = vld [vmem:[#allocation2] sm:$0xff]
        %v445 = vld [vmem:[#allocation2 + $0x8] sm:$0xff]
        %v446 = vld [vmem:[#allocation2 + $0x10] sm:$0xff]
        %v447 = vpack.c.bf16 %v445, %v444
        %v448 = vpack.c.bf16 %v446, %v446
        %v449 = vsel %vm440, 1, 0
        %v450 = vsel %vm441, 1, 0
        %vm451 = vcmp.eq.s32.totalorder %v449, 1
        %vm452 = vcmp.eq.s32.totalorder %v450, 1
        %vm453 = vmpackc.low %vm452, %vm451
        %v454 = vsel %vm453, 65537, 0
        %455 = vrot.lane.b32.xlu0 %v454, 111
        %v456 = vpop.permute.xlu0 %455
        %v457 = vrot.slane %v456, 4
        %vm458 = vcmask 908288
        %v459 = vsel %vm458, %v457, %v456
        %v460 = vunpack.c.l.b16 %v459
        %v461 = vunpack.c.h.b16 %v459
        %v462 = vunpack.c.l.b16 0
        %v463 = vunpack.c.h.b16 0
        %vm464 = vcmp.ne.s32.totalorder %v460, %v462
        %vm465 = vcmp.ne.s32.totalorder %v461, %v463
        %vm466 = vmpackc.low %vm465, %vm464
        %v467 = vunpack.c.l.b16 %v457
        %v468 = vunpack.c.h.b16 %v457
        %v469 = vunpack.c.l.b16 0
        %v470 = vunpack.c.h.b16 0
        %vm471 = vcmp.ne.s32.totalorder %v467, %v469
        %vm472 = vcmp.ne.s32.totalorder %v468, %v470
        %vm473 = vmpackc.low %vm472, %vm471
        %v474 = vsel %vm466, %v447, 0
        %v475 = vsel %vm473, %v448, 0
        %v476 = vld [vmem:[%s3] sm:$0xf]
        %v477 = vpack.c.bf16 %v444, %v444
        %v478 = vpack.c.bf16 %v445, %v445
        %s479 = scalar_lea.vmem %s3, 4
        %v480 = vld [vmem:[%s479] sm:$0xf]
        %484 = vrot.lane.b32.xlu0 %v477, 16
        %v485 = vpop.permute.xlu0 %484
        %486 = vrot.lane.b32.xlu0 %v478, 16
        %v487 = vpop.permute.xlu0 %486
        %488 = vrot.lane.b32.xlu0 %v448, 16
        %v489 = vpop.permute.xlu0 %488
        %vm490 = vcmask 130048
        %v491 = vsel %vm490, %v485, %v487
        %v492 = vsel %vm490, %v487, %v489
        %vm493 = vcmask 64512
        %v495 = vsel %vm493, %v480, 0
        %vm497 = vcmask 1043456
        %v499 = vsel %vm497, %v491, 0
        %v502 = vsel %vm497, %v492, 0
        %504 = vmatpush.bf16.msra.mxu0 0
        %505 = vmatpush.bf16.msra.mxu0 0
        %506 = vmatpush.bf16.msra.mxu0 0
        %507 = vmatpush.bf16.msra.mxu0 0
        %508 = vmatpush.bf16.msra.mxu0 0
        %509 = vmatpush.bf16.msra.mxu0 0
        %510 = vmatpush.bf16.msra.mxu0 0
        %511 = vmatpush.bf16.msra.mxu0 %v499
        %512 = vmatmul.bf16.gmra.mxu0 %v495
        %v513 = vpop.f32.mrf.mxu0
        %v514 = vadd.f32 0.0, %v513
        %v515 = vpop.f32.mrf.mxu0
        %516 = vdwg.mxu0
        %517 = vmatpush.bf16.msra.mxu0 0
        %518 = vmatpush.bf16.msra.mxu0 0
        %519 = vmatpush.bf16.msra.mxu0 0
        %520 = vmatpush.bf16.msra.mxu0 0
        %521 = vmatpush.bf16.msra.mxu0 0
        %522 = vmatpush.bf16.msra.mxu0 0
        %523 = vmatpush.bf16.msra.mxu0 0
        %524 = vmatpush.bf16.msra.mxu0 %v502
        %525 = vmatmul.bf16.gmra.mxu0 %v495
        %v526 = vpop.f32.mrf.mxu0
        %v527 = vadd.f32 0.0, %v526
        %v528 = vpop.f32.mrf.mxu0
        %529 = vdwg.mxu0
        %v532 = vunpack.c.l.b16 %v474
        %v533 = vunpack.c.h.b16 %v474
        %v534 = vunpack.c.l.b16 %v475
        %v535 = vpack.c.b16 %v532, %v532
        %v536 = vpack.c.b16 %v533, %v533
        %v537 = vpack.c.b16 %v534, %v534
        %538 = vrot.lane.b32.xlu0 %v535, 17
        %v539 = vpop.permute.xlu0 %538
        %540 = vrot.lane.b32.xlu0 %v536, 17
        %v541 = vpop.permute.xlu0 %540
        %542 = vrot.lane.b32.xlu0 %v537, 17
        %v543 = vpop.permute.xlu0 %542
        %vm544 = vcmask 138240
        %v545 = vsel %vm544, %v539, %v541
        %v546 = vsel %vm544, %v541, %v543
        %v548 = vsel %vm493, %v476, 0
        %v551 = vsel %vm497, %v545, 0
        %v554 = vsel %vm497, %v546, 0
        %556 = vmatpush.bf16.msra.mxu0 0
        %557 = vmatpush.bf16.msra.mxu0 0
        %558 = vmatpush.bf16.msra.mxu0 0
        %559 = vmatpush.bf16.msra.mxu0 0
        %560 = vmatpush.bf16.msra.mxu0 0
        %561 = vmatpush.bf16.msra.mxu0 0
        %562 = vmatpush.bf16.msra.mxu0 0
        %563 = vmatpush.bf16.msra.mxu0 %v551
        %564 = vmatmul.bf16.gmra.mxu0 %v548
        %v565 = vpop.f32.mrf.mxu0
        %v566 = vadd.f32 %v514, %v565
        %v567 = vpop.f32.mrf.mxu0
        %568 = vdwg.mxu0
        %569 = vmatpush.bf16.msra.mxu0 0
        %570 = vmatpush.bf16.msra.mxu0 0
        %571 = vmatpush.bf16.msra.mxu0 0
        %572 = vmatpush.bf16.msra.mxu0 0
        %573 = vmatpush.bf16.msra.mxu0 0
        %574 = vmatpush.bf16.msra.mxu0 0
        %575 = vmatpush.bf16.msra.mxu0 0
        %576 = vmatpush.bf16.msra.mxu0 %v554
        %577 = vmatmul.bf16.gmra.mxu0 %v548
        %v578 = vpop.f32.mrf.mxu0
        %v579 = vadd.f32 %v527, %v578
        %v580 = vpop.f32.mrf.mxu0
        %581 = vdwg.mxu0
        %v582 = vsel %vm442, 1, 0
        %v583 = vsel %vm443, 1, 0
        %vm584 = vcmp.eq.s32.totalorder %v582, 1
        %vm585 = vcmp.eq.s32.totalorder %v583, 1
        %vm586 = vmpackc.low %vm585, %vm584
        %v587 = vsel %vm586, 65537, 0
        %588 = vrot.lane.b32.xlu0 %v587, 113
        %v589 = vpop.permute.xlu0 %588
        %v590 = vrot.slane %v589, 4
        %vm591 = vcmask 924672
        %v592 = vsel %vm591, %v590, %v589
        %v593 = vunpack.c.l.b16 %v592
        %v594 = vunpack.c.h.b16 %v592
        %v595 = vunpack.c.l.b16 0
        %v596 = vunpack.c.h.b16 0
        %vm597 = vcmp.ne.s32.totalorder %v593, %v595
        %vm598 = vcmp.ne.s32.totalorder %v594, %v596
        %vm599 = vmpackc.low %vm598, %vm597
        %v600 = vunpack.c.l.b16 %v590
        %v601 = vunpack.c.h.b16 %v590
        %v602 = vunpack.c.l.b16 0
        %v603 = vunpack.c.h.b16 0
        %vm604 = vcmp.ne.s32.totalorder %v600, %v602
        %vm605 = vcmp.ne.s32.totalorder %v601, %v603
        %vm606 = vmpackc.low %vm605, %vm604
        %v607 = vsel %vm599, %v447, 0
        %v608 = vsel %vm606, %v448, 0
        %s609 = scalar_lea.vmem %s3, 8
        %v610 = vld [vmem:[%s609] sm:$0xf]
        %v613 = vunpack.c.l.b16 %v607
        %v614 = vunpack.c.h.b16 %v607
        %v615 = vunpack.c.l.b16 %v608
        %v616 = vpack.c.b16 %v613, %v613
        %v617 = vpack.c.b16 %v614, %v614
        %v618 = vpack.c.b16 %v615, %v615
        %619 = vrot.lane.b32.xlu0 %v616, 15
        %v620 = vpop.permute.xlu0 %619
        %621 = vrot.lane.b32.xlu0 %v617, 15
        %v622 = vpop.permute.xlu0 %621
        %623 = vrot.lane.b32.xlu0 %v618, 15
        %v624 = vpop.permute.xlu0 %623
        %vm625 = vcmask 121856
        %v626 = vsel %vm625, %v620, %v622
        %v627 = vsel %vm625, %v622, %v624
        %v629 = vsel %vm493, %v610, 0
        %v632 = vsel %vm497, %v626, 0
        %v635 = vsel %vm497, %v627, 0
        %637 = vmatpush.bf16.msra.mxu0 0
        %638 = vmatpush.bf16.msra.mxu0 0
        %639 = vmatpush.bf16.msra.mxu0 0
        %640 = vmatpush.bf16.msra.mxu0 0
        %641 = vmatpush.bf16.msra.mxu0 0
        %642 = vmatpush.bf16.msra.mxu0 0
        %643 = vmatpush.bf16.msra.mxu0 0
        %644 = vmatpush.bf16.msra.mxu0 %v632
        %645 = vmatmul.bf16.gmra.mxu0 %v629
        %v646 = vpop.f32.mrf.mxu0
        %v647 = vadd.f32 0.0, %v646
        %v648 = vpop.f32.mrf.mxu0
        %649 = vdwg.mxu0
        %650 = vmatpush.bf16.msra.mxu0 0
        %651 = vmatpush.bf16.msra.mxu0 0
        %652 = vmatpush.bf16.msra.mxu0 0
        %653 = vmatpush.bf16.msra.mxu0 0
        %654 = vmatpush.bf16.msra.mxu0 0
        %655 = vmatpush.bf16.msra.mxu0 0
        %656 = vmatpush.bf16.msra.mxu0 0
        %657 = vmatpush.bf16.msra.mxu0 %v635
        %658 = vmatmul.bf16.gmra.mxu0 %v629
        %v659 = vpop.f32.mrf.mxu0
        %v660 = vadd.f32 0.0, %v659
        %v661 = vpop.f32.mrf.mxu0
        %662 = vdwg.mxu0
        %v663 = vadd.f32 %v566, %v647
        %v664 = vadd.f32 %v579, %v660
        %665 = vrot.lane.b32.xlu0 %v454, 127
        %v666 = vpop.permute.xlu0 %665
        %v667 = vrot.slane %v666, 4
        %vm668 = vcmask 1039360
        %v669 = vsel %vm668, %v667, %v666
        %v670 = vunpack.c.l.b16 %v669
        %v671 = vunpack.c.h.b16 %v669
        %v672 = vunpack.c.l.b16 0
        %v673 = vunpack.c.h.b16 0
        %vm674 = vcmp.ne.s32.totalorder %v670, %v672
        %vm675 = vcmp.ne.s32.totalorder %v671, %v673
        %vm676 = vmpackc.low %vm675, %vm674
        %v677 = vunpack.c.l.b16 %v667
        %v678 = vunpack.c.h.b16 %v667
        %v679 = vunpack.c.l.b16 0
        %v680 = vunpack.c.h.b16 0
        %vm681 = vcmp.ne.s32.totalorder %v677, %v679
        %vm682 = vcmp.ne.s32.totalorder %v678, %v680
        %vm683 = vmpackc.low %vm682, %vm681
        %v684 = vsel %vm676, %v447, 0
        %v685 = vsel %vm683, %v448, 0
        %s686 = scalar_lea.vmem %s3, 12
        %v687 = vld [vmem:[%s686] sm:$0xf]
        %v690 = vunpack.c.l.b16 %v684
        %v691 = vunpack.c.h.b16 %v684
        %v692 = vunpack.c.l.b16 %v685
        %v693 = vpack.c.b16 %v690, %v690
        %v694 = vpack.c.b16 %v691, %v691
        %v695 = vpack.c.b16 %v692, %v692
        %696 = vrot.lane.b32.xlu0 %v693, 1
        %v697 = vpop.permute.xlu0 %696
        %698 = vrot.lane.b32.xlu0 %v694, 1
        %v699 = vpop.permute.xlu0 %698
        %700 = vrot.lane.b32.xlu0 %v695, 1
        %v701 = vpop.permute.xlu0 %700
        %vm702 = vcmask 7168
        %v703 = vsel %vm702, %v697, %v699
        %v704 = vsel %vm702, %v699, %v701
        %v706 = vsel %vm493, %v687, 0
        %v709 = vsel %vm497, %v703, 0
        %v712 = vsel %vm497, %v704, 0
        %714 = vmatpush.bf16.msra.mxu0 0
        %715 = vmatpush.bf16.msra.mxu0 0
        %716 = vmatpush.bf16.msra.mxu0 0
        %717 = vmatpush.bf16.msra.mxu0 0
        %718 = vmatpush.bf16.msra.mxu0 0
        %719 = vmatpush.bf16.msra.mxu0 0
        %720 = vmatpush.bf16.msra.mxu0 0
        %721 = vmatpush.bf16.msra.mxu0 %v709
        %722 = vmatmul.bf16.gmra.mxu0 %v706
        %v723 = vpop.f32.mrf.mxu0
        %v724 = vadd.f32 0.0, %v723
        %v725 = vpop.f32.mrf.mxu0
        %726 = vdwg.mxu0
        %727 = vmatpush.bf16.msra.mxu0 0
        %728 = vmatpush.bf16.msra.mxu0 0
        %729 = vmatpush.bf16.msra.mxu0 0
        %730 = vmatpush.bf16.msra.mxu0 0
        %731 = vmatpush.bf16.msra.mxu0 0
        %732 = vmatpush.bf16.msra.mxu0 0
        %733 = vmatpush.bf16.msra.mxu0 0
        %734 = vmatpush.bf16.msra.mxu0 %v712
        %735 = vmatmul.bf16.gmra.mxu0 %v706
        %v736 = vpop.f32.mrf.mxu0
        %v737 = vadd.f32 0.0, %v736
        %v738 = vpop.f32.mrf.mxu0
        %739 = vdwg.mxu0
        %v740 = vadd.f32 %v663, %v724
        %v741 = vadd.f32 %v664, %v737
        %s742 = scalar_lea.vmem %s3, 16
        %v743 = vld [vmem:[%s742] sm:$0xf]
        %v745 = vsel %vm493, %v743, 0
        %v748 = vsel %vm497, %v478, 0
        %v751 = vsel %vm497, %v448, 0
        %753 = vmatpush.bf16.msra.mxu0 0
        %754 = vmatpush.bf16.msra.mxu0 0
        %755 = vmatpush.bf16.msra.mxu0 0
        %756 = vmatpush.bf16.msra.mxu0 0
        %757 = vmatpush.bf16.msra.mxu0 0
        %758 = vmatpush.bf16.msra.mxu0 0
        %759 = vmatpush.bf16.msra.mxu0 0
        %760 = vmatpush.bf16.msra.mxu0 %v748
        %761 = vmatmul.bf16.gmra.mxu0 %v745
        %v762 = vpop.f32.mrf.mxu0
        %v763 = vadd.f32 0.0, %v762
        %v764 = vpop.f32.mrf.mxu0
        %765 = vdwg.mxu0
        %766 = vmatpush.bf16.msra.mxu0 0
        %767 = vmatpush.bf16.msra.mxu0 0
        %768 = vmatpush.bf16.msra.mxu0 0
        %769 = vmatpush.bf16.msra.mxu0 0
        %770 = vmatpush.bf16.msra.mxu0 0
        %771 = vmatpush.bf16.msra.mxu0 0
        %772 = vmatpush.bf16.msra.mxu0 0
        %773 = vmatpush.bf16.msra.mxu0 %v751
        %774 = vmatmul.bf16.gmra.mxu0 %v745
        %v775 = vpop.f32.mrf.mxu0
        %v776 = vadd.f32 0.0, %v775
        %v777 = vpop.f32.mrf.mxu0
        %778 = vdwg.mxu0
        %v779 = vadd.f32 %v740, %v763
        %v780 = vadd.f32 %v741, %v776
        %v781 = vld [vmem:[#allocation2 + $0x8] sm:$0xff]
        %v782 = vld [vmem:[#allocation2 + $0x10] sm:$0xff]
        %v783 = vld [vmem:[#allocation2 + $0x18] sm:$0xff]
        %v784 = vpack.c.bf16 %v782, %v781
        %v785 = vpack.c.bf16 %v783, %v783
        %786 = vrot.lane.b32.xlu0 %v587, 1
        %v787 = vpop.permute.xlu0 %786
        %v788 = vrot.slane %v787, 4
        %v789 = vsel %vm702, %v788, %v787
        %v790 = vunpack.c.l.b16 %v789
        %v791 = vunpack.c.h.b16 %v789
        %v792 = vunpack.c.l.b16 0
        %v793 = vunpack.c.h.b16 0
        %vm794 = vcmp.ne.s32.totalorder %v790, %v792
        %vm795 = vcmp.ne.s32.totalorder %v791, %v793
        %vm796 = vmpackc.low %vm795, %vm794
        %v797 = vunpack.c.l.b16 %v788
        %v798 = vunpack.c.h.b16 %v788
        %v799 = vunpack.c.l.b16 0
        %v800 = vunpack.c.h.b16 0
        %vm801 = vcmp.ne.s32.totalorder %v797, %v799
        %vm802 = vcmp.ne.s32.totalorder %v798, %v800
        %vm803 = vmpackc.low %vm802, %vm801
        %v804 = vsel %vm796, %v784, 0
        %v805 = vsel %vm803, %v785, 0
        %s806 = scalar_lea.vmem %s3, 20
        %v807 = vld [vmem:[%s806] sm:$0xf]
        %v810 = vunpack.c.l.b16 %v804
        %v811 = vunpack.c.h.b16 %v804
        %v812 = vunpack.c.l.b16 %v805
        %v813 = vpack.c.b16 %v810, %v810
        %v814 = vpack.c.b16 %v811, %v811
        %v815 = vpack.c.b16 %v812, %v812
        %816 = vrot.lane.b32.xlu0 %v813, 127
        %v817 = vpop.permute.xlu0 %816
        %818 = vrot.lane.b32.xlu0 %v814, 127
        %v819 = vpop.permute.xlu0 %818
        %820 = vrot.lane.b32.xlu0 %v815, 127
        %v821 = vpop.permute.xlu0 %820
        %v822 = vsel %vm668, %v817, %v819
        %v823 = vsel %vm668, %v819, %v821
        %v825 = vsel %vm493, %v807, 0
        %v828 = vsel %vm497, %v822, 0
        %v831 = vsel %vm497, %v823, 0
        %833 = vmatpush.bf16.msra.mxu0 0
        %834 = vmatpush.bf16.msra.mxu0 0
        %835 = vmatpush.bf16.msra.mxu0 0
        %836 = vmatpush.bf16.msra.mxu0 0
        %837 = vmatpush.bf16.msra.mxu0 0
        %838 = vmatpush.bf16.msra.mxu0 0
        %839 = vmatpush.bf16.msra.mxu0 0
        %840 = vmatpush.bf16.msra.mxu0 %v828
        %841 = vmatmul.bf16.gmra.mxu0 %v825
        %v842 = vpop.f32.mrf.mxu0
        %v843 = vadd.f32 0.0, %v842
        %v844 = vpop.f32.mrf.mxu0
        %845 = vdwg.mxu0
        %846 = vmatpush.bf16.msra.mxu0 0
        %847 = vmatpush.bf16.msra.mxu0 0
        %848 = vmatpush.bf16.msra.mxu0 0
        %849 = vmatpush.bf16.msra.mxu0 0
        %850 = vmatpush.bf16.msra.mxu0 0
        %851 = vmatpush.bf16.msra.mxu0 0
        %852 = vmatpush.bf16.msra.mxu0 0
        %853 = vmatpush.bf16.msra.mxu0 %v831
        %854 = vmatmul.bf16.gmra.mxu0 %v825
        %v855 = vpop.f32.mrf.mxu0
        %v856 = vadd.f32 0.0, %v855
        %v857 = vpop.f32.mrf.mxu0
        %858 = vdwg.mxu0
        %v859 = vadd.f32 %v779, %v843
        %v860 = vadd.f32 %v780, %v856
        %861 = vrot.lane.b32.xlu0 %v454, 15
        %v862 = vpop.permute.xlu0 %861
        %v863 = vrot.slane %v862, 4
        %v864 = vsel %vm625, %v863, %v862
        %v865 = vunpack.c.l.b16 %v864
        %v866 = vunpack.c.h.b16 %v864
        %v867 = vunpack.c.l.b16 0
        %v868 = vunpack.c.h.b16 0
        %vm869 = vcmp.ne.s32.totalorder %v865, %v867
        %vm870 = vcmp.ne.s32.totalorder %v866, %v868
        %vm871 = vmpackc.low %vm870, %vm869
        %v872 = vunpack.c.l.b16 %v863
        %v873 = vunpack.c.h.b16 %v863
        %v874 = vunpack.c.l.b16 0
        %v875 = vunpack.c.h.b16 0
        %vm876 = vcmp.ne.s32.totalorder %v872, %v874
        %vm877 = vcmp.ne.s32.totalorder %v873, %v875
        %vm878 = vmpackc.low %vm877, %vm876
        %v879 = vsel %vm871, %v784, 0
        %v880 = vsel %vm878, %v785, 0
        %s881 = scalar_lea.vmem %s3, 24
        %v882 = vld [vmem:[%s881] sm:$0xf]
        %v885 = vunpack.c.l.b16 %v879
        %v886 = vunpack.c.h.b16 %v879
        %v887 = vunpack.c.l.b16 %v880
        %v888 = vpack.c.b16 %v885, %v885
        %v889 = vpack.c.b16 %v886, %v886
        %v890 = vpack.c.b16 %v887, %v887
        %891 = vrot.lane.b32.xlu0 %v888, 113
        %v892 = vpop.permute.xlu0 %891
        %893 = vrot.lane.b32.xlu0 %v889, 113
        %v894 = vpop.permute.xlu0 %893
        %895 = vrot.lane.b32.xlu0 %v890, 113
        %v896 = vpop.permute.xlu0 %895
        %v897 = vsel %vm591, %v892, %v894
        %v898 = vsel %vm591, %v894, %v896
        %v900 = vsel %vm493, %v882, 0
        %v903 = vsel %vm497, %v897, 0
        %v906 = vsel %vm497, %v898, 0
        %908 = vmatpush.bf16.msra.mxu0 0
        %909 = vmatpush.bf16.msra.mxu0 0
        %910 = vmatpush.bf16.msra.mxu0 0
        %911 = vmatpush.bf16.msra.mxu0 0
        %912 = vmatpush.bf16.msra.mxu0 0
        %913 = vmatpush.bf16.msra.mxu0 0
        %914 = vmatpush.bf16.msra.mxu0 0
        %915 = vmatpush.bf16.msra.mxu0 %v903
        %916 = vmatmul.bf16.gmra.mxu0 %v900
        %v917 = vpop.f32.mrf.mxu0
        %v918 = vadd.f32 0.0, %v917
        %v919 = vpop.f32.mrf.mxu0
        %920 = vdwg.mxu0
        %921 = vmatpush.bf16.msra.mxu0 0
        %922 = vmatpush.bf16.msra.mxu0 0
        %923 = vmatpush.bf16.msra.mxu0 0
        %924 = vmatpush.bf16.msra.mxu0 0
        %925 = vmatpush.bf16.msra.mxu0 0
        %926 = vmatpush.bf16.msra.mxu0 0
        %927 = vmatpush.bf16.msra.mxu0 0
        %928 = vmatpush.bf16.msra.mxu0 %v906
        %929 = vmatmul.bf16.gmra.mxu0 %v900
        %v930 = vpop.f32.mrf.mxu0
        %v931 = vadd.f32 0.0, %v930
        %v932 = vpop.f32.mrf.mxu0
        %933 = vdwg.mxu0
        %v934 = vadd.f32 %v859, %v918
        %v935 = vadd.f32 %v860, %v931
        %v936 = vpack.c.bf16 %v781, %v781
        %v937 = vpack.c.bf16 %v782, %v782
        %s938 = scalar_lea.vmem %s3, 28
        %v939 = vld [vmem:[%s938] sm:$0xf]
        %943 = vrot.lane.b32.xlu0 %v936, 112
        %v944 = vpop.permute.xlu0 %943
        %945 = vrot.lane.b32.xlu0 %v937, 112
        %v946 = vpop.permute.xlu0 %945
        %947 = vrot.lane.b32.xlu0 %v785, 112
        %v948 = vpop.permute.xlu0 %947
        %vm949 = vcmask 916480
        %v950 = vsel %vm949, %v944, %v946
        %v951 = vsel %vm949, %v946, %v948
        %v953 = vsel %vm493, %v939, 0
        %v956 = vsel %vm497, %v950, 0
        %v959 = vsel %vm497, %v951, 0
        %961 = vmatpush.bf16.msra.mxu0 0
        %962 = vmatpush.bf16.msra.mxu0 0
        %963 = vmatpush.bf16.msra.mxu0 0
        %964 = vmatpush.bf16.msra.mxu0 0
        %965 = vmatpush.bf16.msra.mxu0 0
        %966 = vmatpush.bf16.msra.mxu0 0
        %967 = vmatpush.bf16.msra.mxu0 0
        %968 = vmatpush.bf16.msra.mxu0 %v956
        %969 = vmatmul.bf16.gmra.mxu0 %v953
        %v970 = vpop.f32.mrf.mxu0
        %v971 = vadd.f32 0.0, %v970
        %v972 = vpop.f32.mrf.mxu0
        %973 = vdwg.mxu0
        %974 = vmatpush.bf16.msra.mxu0 0
        %975 = vmatpush.bf16.msra.mxu0 0
        %976 = vmatpush.bf16.msra.mxu0 0
        %977 = vmatpush.bf16.msra.mxu0 0
        %978 = vmatpush.bf16.msra.mxu0 0
        %979 = vmatpush.bf16.msra.mxu0 0
        %980 = vmatpush.bf16.msra.mxu0 0
        %981 = vmatpush.bf16.msra.mxu0 %v959
        %982 = vmatmul.bf16.gmra.mxu0 %v953
        %v983 = vpop.f32.mrf.mxu0
        %v984 = vadd.f32 0.0, %v983
        %v985 = vpop.f32.mrf.mxu0
        %986 = vdwg.mxu0
        %v987 = vadd.f32 %v934, %v971
        %v988 = vadd.f32 %v935, %v984
        %989 = vrot.lane.b32.xlu0 %v587, 17
        %v990 = vpop.permute.xlu0 %989
        %v991 = vrot.slane %v990, 4
        %v992 = vsel %vm544, %v991, %v990
        %v993 = vunpack.c.l.b16 %v992
        %v994 = vunpack.c.h.b16 %v992
        %v995 = vunpack.c.l.b16 0
        %v996 = vunpack.c.h.b16 0
        %vm997 = vcmp.ne.s32.totalorder %v993, %v995
        %vm998 = vcmp.ne.s32.totalorder %v994, %v996
        %vm999 = vmpackc.low %vm998, %vm997
        %v1000 = vunpack.c.l.b16 %v991
        %v1001 = vunpack.c.h.b16 %v991
        %v1002 = vunpack.c.l.b16 0
        %v1003 = vunpack.c.h.b16 0
        %vm1004 = vcmp.ne.s32.totalorder %v1000, %v1002
        %vm1005 = vcmp.ne.s32.totalorder %v1001, %v1003
        %vm1006 = vmpackc.low %vm1005, %vm1004
        %v1007 = vsel %vm999, %v784, 0
        %v1008 = vsel %vm1006, %v785, 0
        %s1009 = scalar_lea.vmem %s3, 32
        %v1010 = vld [vmem:[%s1009] sm:$0xf]
        %v1013 = vunpack.c.l.b16 %v1007
        %v1014 = vunpack.c.h.b16 %v1007
        %v1015 = vunpack.c.l.b16 %v1008
        %v1016 = vpack.c.b16 %v1013, %v1013
        %v1017 = vpack.c.b16 %v1014, %v1014
        %v1018 = vpack.c.b16 %v1015, %v1015
        %1019 = vrot.lane.b32.xlu0 %v1016, 111
        %v1020 = vpop.permute.xlu0 %1019
        %1021 = vrot.lane.b32.xlu0 %v1017, 111
        %v1022 = vpop.permute.xlu0 %1021
        %1023 = vrot.lane.b32.xlu0 %v1018, 111
        %v1024 = vpop.permute.xlu0 %1023
        %v1025 = vsel %vm458, %v1020, %v1022
        %v1026 = vsel %vm458, %v1022, %v1024
        %v1028 = vsel %vm493, %v1010, 0
        %v1031 = vsel %vm497, %v1025, 0
        %v1034 = vsel %vm497, %v1026, 0
        %1036 = vmatpush.bf16.msra.mxu0 0
        %1037 = vmatpush.bf16.msra.mxu0 0
        %1038 = vmatpush.bf16.msra.mxu0 0
        %1039 = vmatpush.bf16.msra.mxu0 0
        %1040 = vmatpush.bf16.msra.mxu0 0
        %1041 = vmatpush.bf16.msra.mxu0 0
        %1042 = vmatpush.bf16.msra.mxu0 0
        %1043 = vmatpush.bf16.msra.mxu0 %v1031
        %1044 = vmatmul.bf16.gmra.mxu0 %v1028
        %v1045 = vpop.f32.mrf.mxu0
        %v1046 = vadd.f32 0.0, %v1045
        %v1047 = vpop.f32.mrf.mxu0
        %1048 = vdwg.mxu0
        %1049 = vmatpush.bf16.msra.mxu0 0
        %1050 = vmatpush.bf16.msra.mxu0 0
        %1051 = vmatpush.bf16.msra.mxu0 0
        %1052 = vmatpush.bf16.msra.mxu0 0
        %1053 = vmatpush.bf16.msra.mxu0 0
        %1054 = vmatpush.bf16.msra.mxu0 0
        %1055 = vmatpush.bf16.msra.mxu0 0
        %1056 = vmatpush.bf16.msra.mxu0 %v1034
        %1057 = vmatmul.bf16.gmra.mxu0 %v1028
        %v1058 = vpop.f32.mrf.mxu0
        %v1059 = vadd.f32 0.0, %v1058
        %v1060 = vpop.f32.mrf.mxu0
        %1061 = vdwg.mxu0
        %v1062 = vadd.f32 %v987, %v1046
        %v1063 = vadd.f32 %v988, %v1059
        %v1064 = vld [vmem:[%s4] sm:$0xff]
        %1066 = vset.pattern.permute.xlu0 0
        %1067 = vperm.xlu0 %1066, %v1064
        %v1068 = vpop.permute.xlu0 %1067
        %v1070 = vadd.f32 %v1062, %v1068
        %v1071 = vadd.f32 %v1063, %v1068
        %v1072 = vmax.f32 %v1070, 0.0
        %v1073 = vmax.f32 %v1071, 0.0
        %v1074 = vpack.c.bf16 %v1072, %v1072
        %v1075 = vpack.c.bf16 %v1073, %v1073
        %v1076 = vld [vmem:[%s5] sm:$0xf]
        %v1077 = vld [vmem:[%s5 + $0x4] sm:$0xf]
        %v1078 = vld [vmem:[%s5 + $0x8] sm:$0xf]
        %v1079 = vld [vmem:[%s5 + $0xc] sm:$0xf]
        %v1080 = vld [vmem:[%s6] sm:$0xff]
        %v1081 = vld [vmem:[%s6 + $0x8] sm:$0xff]
        %v1082 = vld [vmem:[%s6 + $0x10] sm:$0xff]
        %v1083 = vld [vmem:[%s6 + $0x18] sm:$0xff]
        %1085 = vset.pattern.permute.xlu0 0
        %1086 = vperm.xlu0 %1085, %v1080
        %v1087 = vpop.permute.xlu0 %1086
        %1090 = vset.pattern.permute.xlu0 0
        %1091 = vperm.xlu0 %1090, %v1081
        %v1092 = vpop.permute.xlu0 %1091
        %1095 = vset.pattern.permute.xlu0 0
        %1096 = vperm.xlu0 %1095, %v1082
        %v1097 = vpop.permute.xlu0 %1096
        %1100 = vset.pattern.permute.xlu0 0
        %1101 = vperm.xlu0 %1100, %v1083
        %v1102 = vpop.permute.xlu0 %1101
        %v1108 = vunpack.c.l.b16 %v1076
        %v1109 = vunpack.c.l.b16 %v1077
        %v1110 = vunpack.c.l.b16 %v1078
        %v1111 = vunpack.c.l.b16 %v1079
        %v1112 = vpack.c.b16 %v1109, %v1108
        %v1113 = vpack.c.b16 %v1111, %v1110
        %v1115 = vsel %vm493, %v1112, 0
        %v1118 = vsel %vm493, %v1113, 0
        %v1121 = vsel %vm497, %v1074, 0
        %v1124 = vsel %vm497, %v1075, 0
        %1126 = vmatpush.bf16.msra.mxu0 0
        %1127 = vmatpush.bf16.msra.mxu0 0
        %1128 = vmatpush.bf16.msra.mxu0 0
        %1129 = vmatpush.bf16.msra.mxu0 0
        %1130 = vmatpush.bf16.msra.mxu0 0
        %1131 = vmatpush.bf16.msra.mxu0 0
        %1132 = vmatpush.bf16.msra.mxu0 0
        %1133 = vmatpush.bf16.msra.mxu0 %v1121
        %1134 = vmatmul.bf16.gmra.mxu0 %v1115
        %v1135 = vpop.f32.mrf.mxu0
        %v1136 = vadd.f32 %v1087, %v1135
        %v1137 = vpop.f32.mrf.mxu0
        %v1138 = vadd.f32 %v1092, %v1137
        %1139 = vmatmul.bf16.gmra.mxu0 %v1118
        %v1140 = vpop.f32.mrf.mxu0
        %v1141 = vadd.f32 %v1097, %v1140
        %v1142 = vpop.f32.mrf.mxu0
        %v1143 = vadd.f32 %v1102, %v1142
        %1144 = vdwg.mxu0
        %1145 = vmatpush.bf16.msra.mxu0 0
        %1146 = vmatpush.bf16.msra.mxu0 0
        %1147 = vmatpush.bf16.msra.mxu0 0
        %1148 = vmatpush.bf16.msra.mxu0 0
        %1149 = vmatpush.bf16.msra.mxu0 0
        %1150 = vmatpush.bf16.msra.mxu0 0
        %1151 = vmatpush.bf16.msra.mxu0 0
        %1152 = vmatpush.bf16.msra.mxu0 %v1124
        %1153 = vmatmul.bf16.gmra.mxu0 %v1115
        %v1154 = vpop.f32.mrf.mxu0
        %v1155 = vadd.f32 %v1087, %v1154
        %v1156 = vpop.f32.mrf.mxu0
        %v1157 = vadd.f32 %v1092, %v1156
        %1158 = vmatmul.bf16.gmra.mxu0 %v1118
        %v1159 = vpop.f32.mrf.mxu0
        %v1160 = vadd.f32 %v1097, %v1159
        %v1161 = vpop.f32.mrf.mxu0
        %v1162 = vadd.f32 %v1102, %v1161
        %1163 = vdwg.mxu0
        %v1164 = vadd.f32 %v1136, %v1155
        %1165 = vadd.xlane.f32.xlu0 %v1164
        %v1166 = vpop.xlane.xlu0 %1165
        %v1167 = vadd.f32 %v1138, %v1157
        %1168 = vadd.xlane.f32.xlu0 %v1167
        %v1169 = vpop.xlane.xlu0 %1168
        %v1170 = vadd.f32 %v1141, %v1160
        %1171 = vadd.xlane.f32.xlu0 %v1170
        %v1172 = vpop.xlane.xlu0 %1171
        %v1173 = vadd.f32 %v1143, %v1162
        %1174 = vadd.xlane.f32.xlu0 %v1173
        %v1175 = vpop.xlane.xlu0 %1174
        %v1176 = vmul.f32 %v1166, 0.00390625
        %v1177 = vmul.f32 %v1169, 0.00390625
        %v1178 = vmul.f32 %v1172, 0.00390625
        %v1179 = vmul.f32 %v1175, 0.00390625
        %v1180 = vld [vmem:[%s7] sm:$0xff]
        %v1181 = vld [vmem:[%s7 + $0x8] sm:$0xff]
        %v1182 = vld [vmem:[%s7 + $0x10] sm:$0xff]
        %v1183 = vld [vmem:[%s7 + $0x18] sm:$0xff]
        %v1184 = vmul.f32 %v1180, %v1176
        %v1185 = vmul.f32 %v1181, %v1177
        %v1186 = vmul.f32 %v1182, %v1178
        %v1187 = vmul.f32 %v1183, %v1179
        %v1188 = vsel %vm493, %v1184, 0.0
        %v1189 = vsel %vm493, %v1185, 0.0
        %v1190 = vadd.f32 %v1188, %v1189
        %v1191 = vsel %vm493, %v1186, 0.0
        %v1192 = vadd.f32 %v1190, %v1191
        %v1193 = vsel %vm493, %v1187, 0.0
        %v1194 = vadd.f32 %v1192, %v1193
        %v1195 = vrot.slane %v1194, 4
        %v1196 = vadd.f32 %v1194, %v1195
        %v1197 = vrot.slane %v1196, 2
        %v1198 = vadd.f32 %v1196, %v1197
        %v1199 = vrot.slane %v1198, 1
        %v1200 = vadd.f32 %v1198, %v1199
        %v1201 = vmax.f32 %v1200, 0.0
        %v1202 = vld [vmem:[%s8] sm:$0xff]
        %v1203 = vld [vmem:[%s8 + $0x8] sm:$0xff]
        %v1204 = vld [vmem:[%s8 + $0x10] sm:$0xff]
        %v1205 = vld [vmem:[%s8 + $0x18] sm:$0xff]
        %v1206 = vmul.f32 %v1202, %v1201
        %v1207 = vmul.f32 %v1203, %v1201
        %v1208 = vmul.f32 %v1204, %v1201
        %v1209 = vmul.f32 %v1205, %v1201
        %v1210 = vsel %vm493, %v1206, 0.0
        %1211 = vadd.xlane.f32.xlu0 %v1210
        %v1212 = vpop.xlane.xlu0 %1211
        %v1213 = vsel %vm493, %v1207, 0.0
        %1214 = vadd.xlane.f32.xlu0 %v1213
        %v1215 = vpop.xlane.xlu0 %1214
        %v1216 = vsel %vm493, %v1208, 0.0
        %1217 = vadd.xlane.f32.xlu0 %v1216
        %v1218 = vpop.xlane.xlu0 %1217
        %v1219 = vsel %vm493, %v1209, 0.0
        %1220 = vadd.xlane.f32.xlu0 %v1219
        %v1221 = vpop.xlane.xlu0 %1220
        %v1222 = vsub.f32 0.0, %v1212
        %v1223 = vsub.f32 0.0, %v1215
        %v1224 = vsub.f32 0.0, %v1218
        %v1225 = vsub.f32 0.0, %v1221
        %v1226 = vmul.f32 %v1222, 1.442695
        %v1227 = vpow.pop %v1226
        %v1228 = vmul.f32 %v1223, 1.442695
        %v1229 = vpow.pop %v1228
        %v1230 = vmul.f32 %v1224, 1.442695
        %v1231 = vpow.pop %v1230
        %v1232 = vmul.f32 %v1225, 1.442695
        %v1233 = vpow.pop %v1232
        %v1234 = vadd.f32 %v1227, 1.0
        %v1235 = vadd.f32 %v1229, 1.0
        %v1236 = vadd.f32 %v1231, 1.0
        %v1237 = vadd.f32 %v1233, 1.0
        %v1238 = vrcp.pop %v1234
        %v1239 = vmul.f32 %v1234, %v1238
        %v1240 = vsub.f32 1.0, %v1239
        %v1241 = vmul.f32 %v1238, %v1240
        %v1242 = vadd.f32 %v1238, %v1241
        %vm1243 = vweird.f32 %v1234
        %vm1244 = vweird.f32 %v1238
        %vm1245 = vmor %vm1243, %vm1244
        %v1246 = vsel %vm1245, %v1238, %v1242
        %v1247 = vand.u32 2147483647, %v1234
        %vm1248 = vcmp.eq.f32.partialorder %v1247, 8.507059e+37
        %v1249 = vand.u32 %v1234, 2147483648
        %v1250 = vor.u32 1.1754944e-38, %v1249
        %v1251 = vsel %vm1248, %v1250, %v1246
        %v1252 = vmul.f32 1.0, %v1251
        %v1253 = vrcp.pop %v1235
        %v1254 = vmul.f32 %v1235, %v1253
        %v1255 = vsub.f32 1.0, %v1254
        %v1256 = vmul.f32 %v1253, %v1255
        %v1257 = vadd.f32 %v1253, %v1256
        %vm1258 = vweird.f32 %v1235
        %vm1259 = vweird.f32 %v1253
        %vm1260 = vmor %vm1258, %vm1259
        %v1261 = vsel %vm1260, %v1253, %v1257
        %v1262 = vand.u32 2147483647, %v1235
        %vm1263 = vcmp.eq.f32.partialorder %v1262, 8.507059e+37
        %v1264 = vand.u32 %v1235, 2147483648
        %v1265 = vor.u32 1.1754944e-38, %v1264
        %v1266 = vsel %vm1263, %v1265, %v1261
        %v1267 = vmul.f32 1.0, %v1266
        %v1268 = vrcp.pop %v1236
        %v1269 = vmul.f32 %v1236, %v1268
        %v1270 = vsub.f32 1.0, %v1269
        %v1271 = vmul.f32 %v1268, %v1270
        %v1272 = vadd.f32 %v1268, %v1271
        %vm1273 = vweird.f32 %v1236
        %vm1274 = vweird.f32 %v1268
        %vm1275 = vmor %vm1273, %vm1274
        %v1276 = vsel %vm1275, %v1268, %v1272
        %v1277 = vand.u32 2147483647, %v1236
        %vm1278 = vcmp.eq.f32.partialorder %v1277, 8.507059e+37
        %v1279 = vand.u32 %v1236, 2147483648
        %v1280 = vor.u32 1.1754944e-38, %v1279
        %v1281 = vsel %vm1278, %v1280, %v1276
        %v1282 = vmul.f32 1.0, %v1281
        %v1283 = vrcp.pop %v1237
        %v1284 = vmul.f32 %v1237, %v1283
        %v1285 = vsub.f32 1.0, %v1284
        %v1286 = vmul.f32 %v1283, %v1285
        %v1287 = vadd.f32 %v1283, %v1286
        %vm1288 = vweird.f32 %v1237
        %vm1289 = vweird.f32 %v1283
        %vm1290 = vmor %vm1288, %vm1289
        %v1291 = vsel %vm1290, %v1283, %v1287
        %v1292 = vand.u32 2147483647, %v1237
        %vm1293 = vcmp.eq.f32.partialorder %v1292, 8.507059e+37
        %v1294 = vand.u32 %v1237, 2147483648
        %v1295 = vor.u32 1.1754944e-38, %v1294
        %v1296 = vsel %vm1293, %v1295, %v1291
        %v1297 = vmul.f32 1.0, %v1296
        %v1298 = vmul.f32 %v1136, %v1252
        %v1299 = vmul.f32 %v1155, %v1252
        %v1300 = vmul.f32 %v1138, %v1267
        %v1301 = vmul.f32 %v1157, %v1267
        %v1302 = vmul.f32 %v1141, %v1282
        %v1303 = vmul.f32 %v1160, %v1282
        %v1304 = vmul.f32 %v1143, %v1297
        %v1305 = vmul.f32 %v1162, %v1297
        %v1306 = vadd.f32 %v1298, %v356
        %v1307 = vadd.f32 %v1299, %v357
        %v1308 = vadd.f32 %v1300, %v358
        %v1309 = vadd.f32 %v1301, %v359
        %v1310 = vadd.f32 %v1302, %v360
        %v1311 = vadd.f32 %v1303, %v361
        %v1312 = vadd.f32 %v1304, %v362
        %v1313 = vadd.f32 %v1305, %v363
        %v1314 = vmax.f32 %v1306, 0.0
        %v1315 = vmax.f32 %v1307, 0.0
        %v1316 = vmax.f32 %v1308, 0.0
        %v1317 = vmax.f32 %v1309, 0.0
        %v1318 = vmax.f32 %v1310, 0.0
        %v1319 = vmax.f32 %v1311, 0.0
        %v1320 = vmax.f32 %v1312, 0.0
        %v1321 = vmax.f32 %v1313, 0.0
        %1322 = vst [vmem:[%s352] sm:$0xff] %v1314
        %1323 = vst [vmem:[%s352 + $0x8] sm:$0xff] %v1315
        %1324 = vst [vmem:[%s352 + $0x10] sm:$0xff] %v1316
        %1325 = vst [vmem:[%s352 + $0x18] sm:$0xff] %v1317
        %1326 = vst [vmem:[%s352 + $0x20] sm:$0xff] %v1318
        %1327 = vst [vmem:[%s352 + $0x28] sm:$0xff] %v1319
        %1328 = vst [vmem:[%s352 + $0x30] sm:$0xff] %v1320
        %1329 = vst [vmem:[%s352 + $0x38] sm:$0xff] %v1321
        %s1330 = sand.u32 %s228, 1
        %s1331 = scalar_lea.sflag [#allocation5], %s1330
        %s1332 = sand.u32 %s228, 1
        %s1333 = smul.addr %s1332, 64
        %s1334 = scalar_lea.vmem [#allocation6], %s1333
        // Predicated region
        $region61: #{tpu_custom_call.1} parent=55 // pred_check
          %p1335 = pneg %p238
        $region62: #{tpu_custom_call.1} parent=55 // pred_check_branch
          %1337 = sbr.rel (%p1335) target = $region64
        $region63: #{tpu_custom_call.1} parent=55 // pred_region
          %1339 = vsyncadd %s1331, 0
          %s1340 = smul.addr %s26, 8
          %s1341 = smul.addr %s1340, 8
          %s1342 = scalar_lea.hbm %s9, %s1341
          %s1343 = sshll.u32 %s1334, 4
          %s1344 = int_to_ptr.vmem [resolvable:$true] %s1343
          %s1345 = sshll.u32 %s1342, 4
          %s1346 = int_to_ptr.hbm [resolvable:$true] %s1345
          %1351 = dma.vmem_to_hbm [thread:$0]  %s1344, 1024, %s1346, %s1331, 256, 256, 16
        $region64: #{tpu_custom_call.1} parent=55 // pred_fallthru
          _
      $region56: #{tpu_custom_call.1} parent=5 // pred_fallthru
        _
      %p1352 = scmp.le.s32.totalorder 2, %s21
      // Predicated region
      $region65: #{tpu_custom_call.1} parent=5 // pred_check
        %p1353 = pneg %p1352
      $region66: #{tpu_custom_call.1} parent=5 // pred_check_branch
        %1355 = sbr.rel (%p1353) target = $region68
      $region67: #{tpu_custom_call.1} parent=5 // pred_region
        %s1356 = ssub.s32 %s21, 2
        // Predicated region
        $region69: #{tpu_custom_call.1} parent=67 // pred_check
          %p1357 = pneg %p244
        $region70: #{tpu_custom_call.1} parent=67 // pred_check_branch
          %1359 = sbr.rel (%p1357) target = $region72
        $region71: #{tpu_custom_call.1} parent=67 // pred_region
          %s1360 = sand.u32 %s229, 1
          %s1361 = scalar_lea.sflag [#allocation5], %s1360
          %s1362 = sand.u32 %s229, 1
          %s1363 = smul.addr %s1362, 64
          %s1364 = scalar_lea.vmem [#allocation6], %s1363
          %1366 = dma.done %s1361, 1024
        $region72: #{tpu_custom_call.1} parent=67 // pred_fallthru
          _
      $region68: #{tpu_custom_call.1} parent=5 // pred_fallthru
        _
    $region6: #{tpu_custom_call.1} parent=1 // loop_footer
      %s25 = sadd.s32 1, %s21
    $region7: #{tpu_custom_call.1} parent=1 // loop_footer_branch
      %20 = sbr.rel target = $region3
    $region8: #{tpu_custom_call.1} parent=1 // loop_exit
      _
    %1367 = vsyncpa [#allocation4], 1
    %s1368 = scalar_lea.sflag [#allocation4], 1
    %1369 = vsyncpa %s1368, 1
    %1370 = vsyncpa [#allocation5], 1
    %s1371 = scalar_lea.sflag [#allocation5], 1
    %1372 = vsyncpa %s1371, 1

</llo_original>
